<compile_context>
chip_gen: v5e
topology: v5e:2x2
jax: 0.10.0
libtpu: 0.0.40
codegen_flags: <defaults>
</compile_context>

<pallas_src>
import functools
import math

import jax
import jax.numpy as jnp
from jax.experimental import pallas as pl
from jax.experimental.pallas import tpu as pltpu

IN_DIM = 339 * 2          # 678
HID = 512
ACT_DIM = 22
HEAD_DIM = 2 * ACT_DIM    # fused mu|sigma head width (44)
OUT_W = 128               # lane-dense packed output slab width
PACK_USED = 3 * ACT_DIM + 1   # action(22) | mu(22) | sigma(22) | logp(1) = 67
_HALF_LOG_2PI = 0.5 * math.log(2.0 * math.pi)


def _round_up(n, m):
    return ((n + m - 1) // m) * m


def actor_kernel(x_ref, eps_ref,
                 w1_ref, b1_ref, w2_ref, b2_ref, wh_ref, bh_ref,
                 out_ref):
    # L1 + relu  (bf16 operands on the MXU, f32 accumulation)
    x = x_ref[...].astype(jnp.bfloat16)
    h1 = jnp.dot(x, w1_ref[...], preferred_element_type=jnp.float32) + b1_ref[...]
    h1 = jnp.maximum(h1, 0.0)

    # L2 + relu
    h2 = jnp.dot(h1.astype(jnp.bfloat16), w2_ref[...],
                 preferred_element_type=jnp.float32) + b2_ref[...]
    h2 = jnp.maximum(h2, 0.0)

    # fused mu|sigma head: one (512, 44) matmul instead of two (512, 22)
    head = jnp.dot(h2.astype(jnp.bfloat16), wh_ref[...],
                   preferred_element_type=jnp.float32) + bh_ref[...]
    mu = head[:, :ACT_DIM]
    sigma = jnp.clip(head[:, ACT_DIM:], -10.0, 2.0)

    std = jnp.exp(sigma)           # EUP
    eps = eps_ref[...]

    # reparameterized sample: rsample() == mu + std * eps, eps ~ N(0, 1)
    actions = mu + std * eps
    action = jnp.tanh(actions)     # EUP

    # Normal(mu, std).log_prob(actions): z = (actions - mu)/std == eps exactly,
    # and log(std) == sigma, so no divide / extra log is needed.
    log_prob = -0.5 * eps * eps - sigma - _HALF_LOG_2PI
    # tanh-squash correction (same formula as the PyTorch reference)
    log_prob = log_prob - jnp.log(1.0 - action * action + 1e-6)
    logp = jnp.sum(log_prob, axis=1, keepdims=True)   # XLU cross-lane reduce

    # Build the packed [action | mu | sigma | logp | 0...] slab in registers and
    # do ONE dense, unmasked (tb, 128) store (no masked partial lane-stores).
    pad = jnp.zeros((out_ref.shape[0], OUT_W - PACK_USED), jnp.float32)
    out_ref[...] = jnp.concatenate([action, mu, sigma, logp, pad], axis=1)


def init_params(key):
    """Deterministic init matching nn.Linear default: U(-1/sqrt(fan_in), +1/sqrt(fan_in))."""
    ks = jax.random.split(key, 8)

    def linear(kw, kb, fan_in, fan_out):
        bound = 1.0 / math.sqrt(fan_in)
        w = jax.random.uniform(kw, (fan_in, fan_out), jnp.float32, -bound, bound)
        b = jax.random.uniform(kb, (1, fan_out), jnp.float32, -bound, bound)
        return w, b

    w1, b1 = linear(ks[0], ks[1], IN_DIM, HID)
    w2, b2 = linear(ks[2], ks[3], HID, HID)
    wmu, bmu = linear(ks[4], ks[5], HID, ACT_DIM)
    wsg, bsg = linear(ks[6], ks[7], HID, ACT_DIM)
    return dict(w1=w1, b1=b1, w2=w2, b2=b2,
                wmu=wmu, bmu=bmu, wsg=wsg, bsg=bsg)


def prepare_params(params):
    """One-time prep: fuse the two heads and cast matmul weights to bf16."""
    wh = jnp.concatenate([params["wmu"], params["wsg"]], axis=1)   # (512, 44)
    bh = jnp.concatenate([params["bmu"], params["bsg"]], axis=1)   # (1, 44)
    return dict(
        w1=params["w1"].astype(jnp.bfloat16), b1=params["b1"].astype(jnp.float32),
        w2=params["w2"].astype(jnp.bfloat16), b2=params["b2"].astype(jnp.float32),
        wh=wh.astype(jnp.bfloat16), bh=bh.astype(jnp.float32),
    )


@functools.partial(jax.jit, static_argnames=("block_b",))
def actor_forward(x, eps, kparams, block_b=256):
    """x: (B, 678) f32, eps: (B, 22) f32 ~ N(0,1), kparams: output of prepare_params()."""
    B = x.shape[0]
    tb = min(block_b, _round_up(B, 8))          # batch tile (sublane-aligned)
    b_pad = _round_up(B, tb)

    x_p = x.astype(jnp.float32)
    eps_p = eps.astype(jnp.float32)
    if b_pad != B:                              # pad batch to a tile multiple only if needed
        x_p = jnp.pad(x_p, ((0, b_pad - B), (0, 0)))
        eps_p = jnp.pad(eps_p, ((0, b_pad - B), (0, 0)))

    const = lambda i: (0, 0)   # weights: constant block index -> fetched once, stay resident

    out = pl.pallas_call(
        actor_kernel,
        out_shape=jax.ShapeDtypeStruct((b_pad, OUT_W), jnp.float32),
        grid=(b_pad // tb,),
        in_specs=[
            pl.BlockSpec((tb, IN_DIM), lambda i: (i, 0)),       # x tile (full 678-wide rows)
            pl.BlockSpec((tb, ACT_DIM), lambda i: (i, 0)),      # eps tile
            pl.BlockSpec((IN_DIM, HID), const),                 # w1 (bf16)
            pl.BlockSpec((1, HID), const),                      # b1
            pl.BlockSpec((HID, HID), const),                    # w2 (bf16)
            pl.BlockSpec((1, HID), const),                      # b2
            pl.BlockSpec((HID, HEAD_DIM), const),               # fused head weight (bf16)
            pl.BlockSpec((1, HEAD_DIM), const),                 # fused head bias
        ],
        out_specs=pl.BlockSpec((tb, OUT_W), lambda i: (i, 0)),
        compiler_params=pltpu.CompilerParams(
            dimension_semantics=("parallel",),
        ),
    )(x_p, eps_p,
      kparams["w1"], kparams["b1"],
      kparams["w2"], kparams["b2"],
      kparams["wh"], kparams["bh"])

    out = out[:B]
    action = out[:, 0:ACT_DIM]
    mu = out[:, ACT_DIM:2 * ACT_DIM]
    sigma = out[:, 2 * ACT_DIM:3 * ACT_DIM]
    log_probs = out[:, 3 * ACT_DIM:3 * ACT_DIM + 1]
    return action, log_probs, mu, sigma


if __name__ == "__main__":
    key = jax.random.PRNGKey(0)
    k_params, k_x, k_eps = jax.random.split(key, 3)

    B = 8
    params = init_params(k_params)
    kparams = prepare_params(params)
    x = jax.random.normal(k_x, (B, IN_DIM), jnp.float32)
    eps = jax.random.normal(k_eps, (B, ACT_DIM), jnp.float32)

    action, log_probs, mu, sigma = jax.block_until_ready(
        actor_forward(x, eps, kparams))

    assert action.shape == (B, ACT_DIM)
    assert log_probs.shape == (B, 1)
    assert mu.shape == (B, ACT_DIM)
    assert sigma.shape == (B, ACT_DIM)
    assert bool(jnp.all(jnp.isfinite(action)))
    assert bool(jnp.all(jnp.isfinite(log_probs)))
    assert bool(jnp.all(jnp.isfinite(mu)))
    assert bool(jnp.all(sigma <= 2.0)) and bool(jnp.all(sigma >= -10.0))
    assert bool(jnp.all(jnp.abs(action) <= 1.0))

    # TODO(synk): torch.optim.Adam / save_weight / load_weight are training & I/O,
    # not part of the forward pass, and are intentionally not translated.
    print("KERNEL_OK")
</pallas_src>

<mosaic_0001>
module attributes {stable_mosaic.version = 11 : i64} {
  func.func @actor_kernel(%arg0: i32, %arg1: memref<8x678xf32, #tpu.memory_space<vmem>>, %arg2: memref<8x22xf32, #tpu.memory_space<vmem>>, %arg3: memref<678x512xbf16, #tpu.memory_space<vmem>>, %arg4: memref<1x512xf32, #tpu.memory_space<vmem>>, %arg5: memref<512x512xbf16, #tpu.memory_space<vmem>>, %arg6: memref<1x512xf32, #tpu.memory_space<vmem>>, %arg7: memref<512x44xbf16, #tpu.memory_space<vmem>>, %arg8: memref<1x44xf32, #tpu.memory_space<vmem>>, %arg9: memref<8x128xf32, #tpu.memory_space<vmem>>) attributes {dimension_semantics = [#tpu.dimension_semantics<parallel>], iteration_bounds = array<i64: 1>, scalar_prefetch = 0 : i64, scratch_operands = 0 : i64, tpu.core_type = #tpu.core_type<tc>, window_params = [{transform_indices = @transform_0, window_bounds = array<i64: 8, 678>}, {transform_indices = @transform_1, window_bounds = array<i64: 8, 22>}, {pipeline_mode = #tpu.pipeline_mode<synchronous>, transform_indices = @transform_2, window_bounds = array<i64: 678, 512>}, {pipeline_mode = #tpu.pipeline_mode<synchronous>, transform_indices = @transform_3, window_bounds = array<i64: 1, 512>}, {pipeline_mode = #tpu.pipeline_mode<synchronous>, transform_indices = @transform_4, window_bounds = array<i64: 512, 512>}, {pipeline_mode = #tpu.pipeline_mode<synchronous>, transform_indices = @transform_5, window_bounds = array<i64: 1, 512>}, {pipeline_mode = #tpu.pipeline_mode<synchronous>, transform_indices = @transform_6, window_bounds = array<i64: 512, 44>}, {pipeline_mode = #tpu.pipeline_mode<synchronous>, transform_indices = @transform_7, window_bounds = array<i64: 1, 44>}, {transform_indices = @transform_8, window_bounds = array<i64: 8, 128>}]} {
    %c0 = arith.constant 0 : index
    %c0_0 = arith.constant 0 : index
    %0 = vector.load %arg1[%c0, %c0_0] : memref<8x678xf32, #tpu.memory_space<vmem>>, vector<8x678xf32>
    %1 = arith.truncf %0 : vector<8x678xf32> to vector<8x678xbf16>
    %c0_1 = arith.constant 0 : index
    %c0_2 = arith.constant 0 : index
    %2 = vector.load %arg3[%c0_1, %c0_2] : memref<678x512xbf16, #tpu.memory_space<vmem>>, vector<678x512xbf16>
    %cst = arith.constant dense<0.000000e+00> : vector<8x512xf32>
    %3 = tpu.matmul %1, %2, %cst {dimension_numbers = #tpu.dot_dimension_numbers<[1], [0], [0], [1], [0, 0, 1, 1], [], []>} : vector<8x678xbf16>, vector<678x512xbf16>, vector<8x512xf32> -> vector<8x512xf32>
    %c0_3 = arith.constant 0 : index
    %c0_4 = arith.constant 0 : index
    %4 = vector.load %arg4[%c0_3, %c0_4] : memref<1x512xf32, #tpu.memory_space<vmem>>, vector<1x512xf32>
    %5 = vector.broadcast %4 : vector<1x512xf32> to vector<8x512xf32>
    %6 = arith.addf %3, %5 : vector<8x512xf32>
    %cst_5 = arith.constant 0.000000e+00 : f32
    %7 = vector.broadcast %cst_5 : f32 to vector<8x512xf32>
    %8 = arith.maximumf %6, %7 : vector<8x512xf32>
    %9 = arith.truncf %8 : vector<8x512xf32> to vector<8x512xbf16>
    %c0_6 = arith.constant 0 : index
    %c0_7 = arith.constant 0 : index
    %10 = vector.load %arg5[%c0_6, %c0_7] : memref<512x512xbf16, #tpu.memory_space<vmem>>, vector<512x512xbf16>
    %cst_8 = arith.constant dense<0.000000e+00> : vector<8x512xf32>
    %11 = tpu.matmul %9, %10, %cst_8 {dimension_numbers = #tpu.dot_dimension_numbers<[1], [0], [0], [1], [0, 0, 1, 1], [], []>} : vector<8x512xbf16>, vector<512x512xbf16>, vector<8x512xf32> -> vector<8x512xf32>
    %c0_9 = arith.constant 0 : index
    %c0_10 = arith.constant 0 : index
    %12 = vector.load %arg6[%c0_9, %c0_10] : memref<1x512xf32, #tpu.memory_space<vmem>>, vector<1x512xf32>
    %13 = vector.broadcast %12 : vector<1x512xf32> to vector<8x512xf32>
    %14 = arith.addf %11, %13 : vector<8x512xf32>
    %cst_11 = arith.constant 0.000000e+00 : f32
    %15 = vector.broadcast %cst_11 : f32 to vector<8x512xf32>
    %16 = arith.maximumf %14, %15 : vector<8x512xf32>
    %17 = arith.truncf %16 : vector<8x512xf32> to vector<8x512xbf16>
    %c0_12 = arith.constant 0 : index
    %c0_13 = arith.constant 0 : index
    %18 = vector.load %arg7[%c0_12, %c0_13] : memref<512x44xbf16, #tpu.memory_space<vmem>>, vector<512x44xbf16>
    %cst_14 = arith.constant dense<0.000000e+00> : vector<8x44xf32>
    %19 = tpu.matmul %17, %18, %cst_14 {dimension_numbers = #tpu.dot_dimension_numbers<[1], [0], [0], [1], [0, 0, 1, 1], [], []>} : vector<8x512xbf16>, vector<512x44xbf16>, vector<8x44xf32> -> vector<8x44xf32>
    %c0_15 = arith.constant 0 : index
    %c0_16 = arith.constant 0 : index
    %20 = vector.load %arg8[%c0_15, %c0_16] : memref<1x44xf32, #tpu.memory_space<vmem>>, vector<1x44xf32>
    %21 = vector.broadcast %20 : vector<1x44xf32> to vector<8x44xf32>
    %22 = arith.addf %19, %21 : vector<8x44xf32>
    %23 = vector.extract_strided_slice %22 {offsets = [0, 0], sizes = [8, 22], strides = [1, 1]} : vector<8x44xf32> to vector<8x22xf32>
    %24 = vector.extract_strided_slice %22 {offsets = [0, 22], sizes = [8, 22], strides = [1, 1]} : vector<8x44xf32> to vector<8x22xf32>
    %cst_17 = arith.constant -1.000000e+01 : f32
    %cst_18 = arith.constant 2.000000e+00 : f32
    %25 = vector.broadcast %cst_17 : f32 to vector<8x22xf32>
    %26 = arith.maximumf %25, %24 : vector<8x22xf32>
    %27 = vector.broadcast %cst_18 : f32 to vector<8x22xf32>
    %28 = arith.minimumf %27, %26 : vector<8x22xf32>
    %29 = math.exp %28 : vector<8x22xf32>
    %c0_19 = arith.constant 0 : index
    %c0_20 = arith.constant 0 : index
    %30 = vector.load %arg2[%c0_19, %c0_20] : memref<8x22xf32, #tpu.memory_space<vmem>>, vector<8x22xf32>
    %31 = arith.mulf %29, %30 : vector<8x22xf32>
    %32 = arith.addf %23, %31 : vector<8x22xf32>
    %33 = math.tanh %32 : vector<8x22xf32>
    %cst_21 = arith.constant -5.000000e-01 : f32
    %34 = vector.broadcast %cst_21 : f32 to vector<8x22xf32>
    %35 = arith.mulf %34, %30 : vector<8x22xf32>
    %36 = arith.mulf %35, %30 : vector<8x22xf32>
    %37 = arith.subf %36, %28 : vector<8x22xf32>
    %cst_22 = arith.constant 0.918938517 : f32
    %38 = vector.broadcast %cst_22 : f32 to vector<8x22xf32>
    %39 = arith.subf %37, %38 : vector<8x22xf32>
    %40 = arith.mulf %33, %33 : vector<8x22xf32>
    %cst_23 = arith.constant 1.000000e+00 : f32
    %41 = vector.broadcast %cst_23 : f32 to vector<8x22xf32>
    %42 = arith.subf %41, %40 : vector<8x22xf32>
    %cst_24 = arith.constant 9.99999997E-7 : f32
    %43 = vector.broadcast %cst_24 : f32 to vector<8x22xf32>
    %44 = arith.addf %42, %43 : vector<8x22xf32>
    %45 = math.log %44 : vector<8x22xf32>
    %46 = arith.subf %39, %45 : vector<8x22xf32>
    %cst_25 = arith.constant dense<0.000000e+00> : vector<8xf32>
    %47 = vector.multi_reduction <add>, %46, %cst_25 [1] : vector<8x22xf32> to vector<8xf32>
    %48 = vector.shape_cast %47 : vector<8xf32> to vector<8x1xf32>
    %cst_26 = arith.constant 0.000000e+00 : f32
    %49 = vector.broadcast %cst_26 : f32 to vector<8x61xf32>
    %50 = tpu.concatenate %33, %23, %28, %48, %49 in 1 : vector<8x22xf32>, vector<8x22xf32>, vector<8x22xf32>, vector<8x1xf32>, vector<8x61xf32> -> vector<8x128xf32>
    %c0_27 = arith.constant 0 : index
    %c0_28 = arith.constant 0 : index
    %51 = vector.load %arg9[%c0_27, %c0_28] : memref<8x128xf32, #tpu.memory_space<vmem>>, vector<8x128xf32>
    tpu.vector_store %arg9[%c0_27, %c0_28], %50 {strides = array<i32>} : memref<8x128xf32, #tpu.memory_space<vmem>>, vector<8x128xf32>,
    return
  }
  func.func @transform_0(%arg0: i32) -> (i32, i32) {
    %c0_i32 = arith.constant 0 : i32
    %c0_i32_0 = arith.constant 0 : i32
    return %arg0, %c0_i32 : i32, i32
  }
  func.func @transform_1(%arg0: i32) -> (i32, i32) {
    %c0_i32 = arith.constant 0 : i32
    %c0_i32_0 = arith.constant 0 : i32
    return %arg0, %c0_i32 : i32, i32
  }
  func.func @transform_2(%arg0: i32) -> (i32, i32) {
    %c0_i32 = arith.constant 0 : i32
    %c0_i32_0 = arith.constant 0 : i32
    %c0_i32_1 = arith.constant 0 : i32
    return %c0_i32, %c0_i32_0 : i32, i32
  }
  func.func @transform_3(%arg0: i32) -> (i32, i32) {
    %c0_i32 = arith.constant 0 : i32
    %c0_i32_0 = arith.constant 0 : i32
    %c0_i32_1 = arith.constant 0 : i32
    return %c0_i32, %c0_i32_0 : i32, i32
  }
  func.func @transform_4(%arg0: i32) -> (i32, i32) {
    %c0_i32 = arith.constant 0 : i32
    %c0_i32_0 = arith.constant 0 : i32
    %c0_i32_1 = arith.constant 0 : i32
    return %c0_i32, %c0_i32_0 : i32, i32
  }
  func.func @transform_5(%arg0: i32) -> (i32, i32) {
    %c0_i32 = arith.constant 0 : i32
    %c0_i32_0 = arith.constant 0 : i32
    %c0_i32_1 = arith.constant 0 : i32
    return %c0_i32, %c0_i32_0 : i32, i32
  }
  func.func @transform_6(%arg0: i32) -> (i32, i32) {
    %c0_i32 = arith.constant 0 : i32
    %c0_i32_0 = arith.constant 0 : i32
    %c0_i32_1 = arith.constant 0 : i32
    return %c0_i32, %c0_i32_0 : i32, i32
  }
  func.func @transform_7(%arg0: i32) -> (i32, i32) {
    %c0_i32 = arith.constant 0 : i32
    %c0_i32_0 = arith.constant 0 : i32
    %c0_i32_1 = arith.constant 0 : i32
    return %c0_i32, %c0_i32_0 : i32, i32
  }
  func.func @transform_8(%arg0: i32) -> (i32, i32) {
    %c0_i32 = arith.constant 0 : i32
    %c0_i32_0 = arith.constant 0 : i32
    return %arg0, %c0_i32 : i32, i32
  }
}

</mosaic_0001>

<llo_original>
// kernel: actor_forward.1
$region0: #{actor_forward.1}
  #allocation0 [shape = 'u32[]', space=smem, size = 0x4, offset = 0x4, fixed_abs, tag = 'smem constant byte address 0x4 - core index']
  #allocation1 [shape = 'u32[72,128]{1,0:T(1,128)}', space=vmem, size = 0x9000, scoped, tag = 'internal scratch']
  %s0 = inlined_call_operand.vmem [shape: f32[8,678], index: 0, kind: input, shape index: {}]
  %s1 = inlined_call_operand.vmem [shape: f32[8,22], index: 1, kind: input, shape index: {}]
  %s2 = inlined_call_operand.hbm [shape: bf16[678,512], index: 2, kind: input, shape index: {}]
  %s3 = inlined_call_operand.vmem [shape: f32[1,512], index: 3, kind: input, shape index: {}]
  %s4 = inlined_call_operand.hbm [shape: bf16[512,512], index: 4, kind: input, shape index: {}]
  %s5 = inlined_call_operand.vmem [shape: f32[1,512], index: 5, kind: input, shape index: {}]
  %s6 = inlined_call_operand.vmem [shape: bf16[512,44], index: 6, kind: input, shape index: {}]
  %s7 = inlined_call_operand.vmem [shape: f32[1,44], index: 7, kind: input, shape index: {}]
  %s8 = inlined_call_operand.vmem [shape: f32[8,128], index: 8, kind: output, shape index: {}]
  %s9 = sld [smem:[#allocation0]]
  $region50: #{actor_forward.1} parent=0
    _
  %s11 = ssub.s32 1, %s9
  %s12 = scalar_select 0, %s11, %s9
  $region1: #{actor_forward.1} parent=0
    #allocation2 [shape = 'u8[696320]{0}', space=vmem, size = 0xaa000, scoped, tag = 'input window, operand 2, single buffered']
    #allocation3 [shape = 's32[1]{0}', space=sflag, size = 0x4, scoped, tag = 'scoped memory for actor_forward.1']
    #allocation4 [shape = 'u8[524288]{0}', space=vmem, size = 0x80000, scoped, tag = 'input window, operand 4, single buffered']
    #allocation5 [shape = 's32[1]{0}', space=sflag, size = 0x4, scoped, tag = 'scoped memory for actor_forward.1']
    %13 = vsyncpa [#allocation3], 0
    %14 = vsyncpa [#allocation5], 0
    // Predicated region
    $region2: #{actor_forward.1} parent=1 // pred_check
      _
    $region3: #{actor_forward.1} parent=1 // pred_check_branch
      %16 = sbr.rel (0) target = $region5
    $region4: #{actor_forward.1} parent=1 // pred_region
      _
    $region5: #{actor_forward.1} parent=1 // pred_fallthru
      _
    // Predicated region
    $region6: #{actor_forward.1} parent=1 // pred_check
      _
    $region7: #{actor_forward.1} parent=1 // pred_check_branch
      %18 = sbr.rel (0) target = $region9
    $region8: #{actor_forward.1} parent=1 // pred_region
      _
    $region9: #{actor_forward.1} parent=1 // pred_fallthru
      _
    // Predicated region
    $region10: #{actor_forward.1} parent=1 // pred_check
      _
    $region11: #{actor_forward.1} parent=1 // pred_check_branch
      %20 = sbr.rel (0) target = $region13
    $region12: #{actor_forward.1} parent=1 // pred_region
      %22 = vsyncadd [#allocation3], 0
      %s23 = sshll.u32 %s2, 4
      %s24 = int_to_ptr.hbm [resolvable:$true] %s23
      %s25 = sshll.u32 [#allocation2], 4
      %s26 = int_to_ptr.vmem [resolvable:$true] %s25
      %31 = dma.hbm_to_vmem [thread:$0]  %s24, 21760, %s26, [#allocation3], 256, 256, 16
    $region13: #{actor_forward.1} parent=1 // pred_fallthru
      _
    // Predicated region
    $region14: #{actor_forward.1} parent=1 // pred_check
      _
    $region15: #{actor_forward.1} parent=1 // pred_check_branch
      %33 = sbr.rel (0) target = $region17
    $region16: #{actor_forward.1} parent=1 // pred_region
      _
    $region17: #{actor_forward.1} parent=1 // pred_fallthru
      _
    // Predicated region
    $region18: #{actor_forward.1} parent=1 // pred_check
      _
    $region19: #{actor_forward.1} parent=1 // pred_check_branch
      %35 = sbr.rel (0) target = $region21
    $region20: #{actor_forward.1} parent=1 // pred_region
      %37 = vsyncadd [#allocation5], 0
      %s38 = sshll.u32 %s4, 4
      %s39 = int_to_ptr.hbm [resolvable:$true] %s38
      %s40 = sshll.u32 [#allocation4], 4
      %s41 = int_to_ptr.vmem [resolvable:$true] %s40
      %46 = dma.hbm_to_vmem [thread:$0]  %s39, 16384, %s41, [#allocation5], 256, 256, 16
    $region21: #{actor_forward.1} parent=1 // pred_fallthru
      _
    // Predicated region
    $region22: #{actor_forward.1} parent=1 // pred_check
      _
    $region23: #{actor_forward.1} parent=1 // pred_check_branch
      %48 = sbr.rel (0) target = $region25
    $region24: #{actor_forward.1} parent=1 // pred_region
      _
    $region25: #{actor_forward.1} parent=1 // pred_fallthru
      _
    // Predicated region
    $region26: #{actor_forward.1} parent=1 // pred_check
      _
    $region27: #{actor_forward.1} parent=1 // pred_check_branch
      %50 = sbr.rel (0) target = $region29
    $region28: #{actor_forward.1} parent=1 // pred_region
      _
    $region29: #{actor_forward.1} parent=1 // pred_fallthru
      _
    // Predicated region
    $region30: #{actor_forward.1} parent=1 // pred_check
      _
    $region31: #{actor_forward.1} parent=1 // pred_check_branch
      %52 = sbr.rel (0) target = $region33
    $region32: #{actor_forward.1} parent=1 // pred_region
      _
    $region33: #{actor_forward.1} parent=1 // pred_fallthru
      _
    // Predicated region
    $region34: #{actor_forward.1} parent=1 // pred_check
      _
    $region35: #{actor_forward.1} parent=1 // pred_check_branch
      %54 = sbr.rel (0) target = $region37
    $region36: #{actor_forward.1} parent=1 // pred_region
      %56 = dma.done [#allocation3], 21760
    $region37: #{actor_forward.1} parent=1 // pred_fallthru
      _
    // Predicated region
    $region38: #{actor_forward.1} parent=1 // pred_check
      _
    $region39: #{actor_forward.1} parent=1 // pred_check_branch
      %58 = sbr.rel (0) target = $region41
    $region40: #{actor_forward.1} parent=1 // pred_region
      %60 = dma.done [#allocation5], 16384
    $region41: #{actor_forward.1} parent=1 // pred_fallthru
      _
    %v62 = vld [vmem:[%s0] sm:$0xff]
    %v63 = vld [vmem:[%s0 + $0x8] sm:$0xff]
    %v64 = vld [vmem:[%s0 + $0x10] sm:$0xff]
    %v65 = vld [vmem:[%s0 + $0x18] sm:$0xff]
    %v66 = vld [vmem:[%s0 + $0x20] sm:$0xff]
    %v67 = vld [vmem:[%s0 + $0x28] sm:$0xff]
    %v68 = vpack.c.bf16 %v62, %v62
    %v69 = vpack.c.bf16 %v63, %v63
    %v70 = vpack.c.bf16 %v64, %v64
    %v71 = vpack.c.bf16 %v65, %v65
    %v72 = vpack.c.bf16 %v66, %v66
    %v73 = vpack.c.bf16 %v67, %v67
    %v74 = vld [vmem:[#allocation2] sm:$0xff]
    %v75 = vld [vmem:[#allocation2 + $0x8] sm:$0xff]
    %v76 = vld [vmem:[#allocation2 + $0x10] sm:$0xff]
    %v77 = vld [vmem:[#allocation2 + $0x18] sm:$0xff]
    %v78 = vld [vmem:[#allocation2 + $0x20] sm:$0xff]
    %v79 = vld [vmem:[#allocation2 + $0x28] sm:$0xff]
    %v80 = vld [vmem:[#allocation2 + $0x30] sm:$0xff]
    %v81 = vld [vmem:[#allocation2 + $0x38] sm:$0xff]
    %v82 = vld [vmem:[#allocation2 + $0x40] sm:$0xff]
    %v83 = vld [vmem:[#allocation2 + $0x48] sm:$0xff]
    %v84 = vld [vmem:[#allocation2 + $0x50] sm:$0xff]
    %v85 = vld [vmem:[#allocation2 + $0x58] sm:$0xff]
    %v86 = vld [vmem:[#allocation2 + $0x60] sm:$0xff]
    %v87 = vld [vmem:[#allocation2 + $0x68] sm:$0xff]
    %v88 = vld [vmem:[#allocation2 + $0x70] sm:$0xff]
    %v89 = vld [vmem:[#allocation2 + $0x78] sm:$0xff]
    %v90 = vld [vmem:[#allocation2 + $0x80] sm:$0xff]
    %v91 = vld [vmem:[#allocation2 + $0x88] sm:$0xff]
    %v92 = vld [vmem:[#allocation2 + $0x90] sm:$0xff]
    %v93 = vld [vmem:[#allocation2 + $0x98] sm:$0xff]
    %v94 = vld [vmem:[#allocation2 + $0xa0] sm:$0xff]
    %v95 = vld [vmem:[#allocation2 + $0xa8] sm:$0xff]
    %v96 = vld [vmem:[#allocation2 + $0xb0] sm:$0xff]
    %v97 = vld [vmem:[#allocation2 + $0xb8] sm:$0xff]
    %v98 = vld [vmem:[#allocation2 + $0xc0] sm:$0xff]
    %v99 = vld [vmem:[#allocation2 + $0xc8] sm:$0xff]
    %v100 = vld [vmem:[#allocation2 + $0xd0] sm:$0xff]
    %v101 = vld [vmem:[#allocation2 + $0xd8] sm:$0xff]
    %v102 = vld [vmem:[#allocation2 + $0xe0] sm:$0xff]
    %v103 = vld [vmem:[#allocation2 + $0xe8] sm:$0xff]
    %v104 = vld [vmem:[#allocation2 + $0xf0] sm:$0xff]
    %v105 = vld [vmem:[#allocation2 + $0xf8] sm:$0xff]
    %v106 = vld [vmem:[#allocation2 + $0x100] sm:$0xff]
    %v107 = vld [vmem:[#allocation2 + $0x108] sm:$0xff]
    %v108 = vld [vmem:[#allocation2 + $0x110] sm:$0xff]
    %v109 = vld [vmem:[#allocation2 + $0x118] sm:$0xff]
    %v110 = vld [vmem:[#allocation2 + $0x120] sm:$0xff]
    %v111 = vld [vmem:[#allocation2 + $0x128] sm:$0xff]
    %v112 = vld [vmem:[#allocation2 + $0x130] sm:$0xff]
    %v113 = vld [vmem:[#allocation2 + $0x138] sm:$0xff]
    %v114 = vld [vmem:[#allocation2 + $0x140] sm:$0xff]
    %v115 = vld [vmem:[#allocation2 + $0x148] sm:$0xff]
    %v116 = vld [vmem:[#allocation2 + $0x150] sm:$0xff]
    %v117 = vld [vmem:[#allocation2 + $0x158] sm:$0xff]
    %v118 = vld [vmem:[#allocation2 + $0x160] sm:$0xff]
    %v119 = vld [vmem:[#allocation2 + $0x168] sm:$0xff]
    %v120 = vld [vmem:[#allocation2 + $0x170] sm:$0xff]
    %v121 = vld [vmem:[#allocation2 + $0x178] sm:$0xff]
    %v122 = vld [vmem:[#allocation2 + $0x180] sm:$0xff]
    %v123 = vld [vmem:[#allocation2 + $0x188] sm:$0xff]
    %v124 = vld [vmem:[#allocation2 + $0x190] sm:$0xff]
    %v125 = vld [vmem:[#allocation2 + $0x198] sm:$0xff]
    %v126 = vld [vmem:[#allocation2 + $0x1a0] sm:$0xff]
    %v127 = vld [vmem:[#allocation2 + $0x1a8] sm:$0xff]
    %v128 = vld [vmem:[#allocation2 + $0x1b0] sm:$0xff]
    %v129 = vld [vmem:[#allocation2 + $0x1b8] sm:$0xff]
    %v130 = vld [vmem:[#allocation2 + $0x1c0] sm:$0xff]
    %v131 = vld [vmem:[#allocation2 + $0x1c8] sm:$0xff]
    %v132 = vld [vmem:[#allocation2 + $0x1d0] sm:$0xff]
    %v133 = vld [vmem:[#allocation2 + $0x1d8] sm:$0xff]
    %v134 = vld [vmem:[#allocation2 + $0x1e0] sm:$0xff]
    %v135 = vld [vmem:[#allocation2 + $0x1e8] sm:$0xff]
    %v136 = vld [vmem:[#allocation2 + $0x1f0] sm:$0xff]
    %v137 = vld [vmem:[#allocation2 + $0x1f8] sm:$0xff]
    %v138 = vld [vmem:[#allocation2 + $0x200] sm:$0xff]
    %v139 = vld [vmem:[#allocation2 + $0x208] sm:$0xff]
    %v140 = vld [vmem:[#allocation2 + $0x210] sm:$0xff]
    %v141 = vld [vmem:[#allocation2 + $0x218] sm:$0xff]
    %v142 = vld [vmem:[#allocation2 + $0x220] sm:$0xff]
    %v143 = vld [vmem:[#allocation2 + $0x228] sm:$0xff]
    %v144 = vld [vmem:[#allocation2 + $0x230] sm:$0xff]
    %v145 = vld [vmem:[#allocation2 + $0x238] sm:$0xff]
    %v146 = vld [vmem:[#allocation2 + $0x240] sm:$0xff]
    %v147 = vld [vmem:[#allocation2 + $0x248] sm:$0xff]
    %v148 = vld [vmem:[#allocation2 + $0x250] sm:$0xff]
    %v149 = vld [vmem:[#allocation2 + $0x258] sm:$0xff]
    %v150 = vld [vmem:[#allocation2 + $0x260] sm:$0xff]
    %v151 = vld [vmem:[#allocation2 + $0x268] sm:$0xff]
    %v152 = vld [vmem:[#allocation2 + $0x270] sm:$0xff]
    %v153 = vld [vmem:[#allocation2 + $0x278] sm:$0xff]
    %v154 = vld [vmem:[#allocation2 + $0x280] sm:$0xff]
    %v155 = vld [vmem:[#allocation2 + $0x288] sm:$0xff]
    %v156 = vld [vmem:[#allocation2 + $0x290] sm:$0xff]
    %v157 = vld [vmem:[#allocation2 + $0x298] sm:$0xff]
    %v158 = vld [vmem:[#allocation2 + $0x2a0] sm:$0xff]
    %v159 = vld [vmem:[#allocation2 + $0x2a8] sm:$0xff]
    %v160 = vld [vmem:[#allocation2 + $0x2b0] sm:$0xff]
    %v161 = vld [vmem:[#allocation2 + $0x2b8] sm:$0xff]
    %v162 = vld [vmem:[#allocation2 + $0x2c0] sm:$0xff]
    %v163 = vld [vmem:[#allocation2 + $0x2c8] sm:$0xff]
    %v164 = vld [vmem:[#allocation2 + $0x2d0] sm:$0xff]
    %v165 = vld [vmem:[#allocation2 + $0x2d8] sm:$0xff]
    %v166 = vld [vmem:[#allocation2 + $0x2e0] sm:$0xff]
    %v167 = vld [vmem:[#allocation2 + $0x2e8] sm:$0xff]
    %v168 = vld [vmem:[#allocation2 + $0x2f0] sm:$0xff]
    %v169 = vld [vmem:[#allocation2 + $0x2f8] sm:$0xff]
    %v170 = vld [vmem:[#allocation2 + $0x300] sm:$0xff]
    %v171 = vld [vmem:[#allocation2 + $0x308] sm:$0xff]
    %v172 = vld [vmem:[#allocation2 + $0x310] sm:$0xff]
    %v173 = vld [vmem:[#allocation2 + $0x318] sm:$0xff]
    %v174 = vld [vmem:[#allocation2 + $0x320] sm:$0xff]
    %v175 = vld [vmem:[#allocation2 + $0x328] sm:$0xff]
    %v176 = vld [vmem:[#allocation2 + $0x330] sm:$0xff]
    %v177 = vld [vmem:[#allocation2 + $0x338] sm:$0xff]
    %v178 = vld [vmem:[#allocation2 + $0x340] sm:$0xff]
    %v179 = vld [vmem:[#allocation2 + $0x348] sm:$0xff]
    %v180 = vld [vmem:[#allocation2 + $0x350] sm:$0xff]
    %v181 = vld [vmem:[#allocation2 + $0x358] sm:$0xff]
    %v182 = vld [vmem:[#allocation2 + $0x360] sm:$0xff]
    %v183 = vld [vmem:[#allocation2 + $0x368] sm:$0xff]
    %v184 = vld [vmem:[#allocation2 + $0x370] sm:$0xff]
    %v185 = vld [vmem:[#allocation2 + $0x378] sm:$0xff]
    %v186 = vld [vmem:[#allocation2 + $0x380] sm:$0xff]
    %v187 = vld [vmem:[#allocation2 + $0x388] sm:$0xff]
    %v188 = vld [vmem:[#allocation2 + $0x390] sm:$0xff]
    %v189 = vld [vmem:[#allocation2 + $0x398] sm:$0xff]
    %v190 = vld [vmem:[#allocation2 + $0x3a0] sm:$0xff]
    %v191 = vld [vmem:[#allocation2 + $0x3a8] sm:$0xff]
    %v192 = vld [vmem:[#allocation2 + $0x3b0] sm:$0xff]
    %v193 = vld [vmem:[#allocation2 + $0x3b8] sm:$0xff]
    %v194 = vld [vmem:[#allocation2 + $0x3c0] sm:$0xff]
    %v195 = vld [vmem:[#allocation2 + $0x3c8] sm:$0xff]
    %v196 = vld [vmem:[#allocation2 + $0x3d0] sm:$0xff]
    %v197 = vld [vmem:[#allocation2 + $0x3d8] sm:$0xff]
    %v198 = vld [vmem:[#allocation2 + $0x3e0] sm:$0xff]
    %v199 = vld [vmem:[#allocation2 + $0x3e8] sm:$0xff]
    %v200 = vld [vmem:[#allocation2 + $0x3f0] sm:$0xff]
    %v201 = vld [vmem:[#allocation2 + $0x3f8] sm:$0xff]
    %v202 = vld [vmem:[#allocation2 + $0x400] sm:$0xff]
    %v203 = vld [vmem:[#allocation2 + $0x408] sm:$0xff]
    %v204 = vld [vmem:[#allocation2 + $0x410] sm:$0xff]
    %v205 = vld [vmem:[#allocation2 + $0x418] sm:$0xff]
    %v206 = vld [vmem:[#allocation2 + $0x420] sm:$0xff]
    %v207 = vld [vmem:[#allocation2 + $0x428] sm:$0xff]
    %v208 = vld [vmem:[#allocation2 + $0x430] sm:$0xff]
    %v209 = vld [vmem:[#allocation2 + $0x438] sm:$0xff]
    %v210 = vld [vmem:[#allocation2 + $0x440] sm:$0xff]
    %v211 = vld [vmem:[#allocation2 + $0x448] sm:$0xff]
    %v212 = vld [vmem:[#allocation2 + $0x450] sm:$0xff]
    %v213 = vld [vmem:[#allocation2 + $0x458] sm:$0xff]
    %v214 = vld [vmem:[#allocation2 + $0x460] sm:$0xff]
    %v215 = vld [vmem:[#allocation2 + $0x468] sm:$0xff]
    %v216 = vld [vmem:[#allocation2 + $0x470] sm:$0xff]
    %v217 = vld [vmem:[#allocation2 + $0x478] sm:$0xff]
    %v218 = vld [vmem:[#allocation2 + $0x480] sm:$0xff]
    %v219 = vld [vmem:[#allocation2 + $0x488] sm:$0xff]
    %v220 = vld [vmem:[#allocation2 + $0x490] sm:$0xff]
    %v221 = vld [vmem:[#allocation2 + $0x498] sm:$0xff]
    %v222 = vld [vmem:[#allocation2 + $0x4a0] sm:$0xff]
    %v223 = vld [vmem:[#allocation2 + $0x4a8] sm:$0xff]
    %v224 = vld [vmem:[#allocation2 + $0x4b0] sm:$0xff]
    %v225 = vld [vmem:[#allocation2 + $0x4b8] sm:$0xff]
    %v226 = vld [vmem:[#allocation2 + $0x4c0] sm:$0xff]
    %v227 = vld [vmem:[#allocation2 + $0x4c8] sm:$0xff]
    %v228 = vld [vmem:[#allocation2 + $0x4d0] sm:$0xff]
    %v229 = vld [vmem:[#allocation2 + $0x4d8] sm:$0xff]
    %v230 = vld [vmem:[#allocation2 + $0x4e0] sm:$0xff]
    %v231 = vld [vmem:[#allocation2 + $0x4e8] sm:$0xff]
    %v232 = vld [vmem:[#allocation2 + $0x4f0] sm:$0xff]
    %v233 = vld [vmem:[#allocation2 + $0x4f8] sm:$0xff]
    %v234 = vld [vmem:[#allocation2 + $0x500] sm:$0xff]
    %v235 = vld [vmem:[#allocation2 + $0x508] sm:$0xff]
    %v236 = vld [vmem:[#allocation2 + $0x510] sm:$0xff]
    %v237 = vld [vmem:[#allocation2 + $0x518] sm:$0xff]
    %v238 = vld [vmem:[#allocation2 + $0x520] sm:$0xff]
    %v239 = vld [vmem:[#allocation2 + $0x528] sm:$0xff]
    %v240 = vld [vmem:[#allocation2 + $0x530] sm:$0xff]
    %v241 = vld [vmem:[#allocation2 + $0x538] sm:$0xff]
    %v242 = vld [vmem:[#allocation2 + $0x540] sm:$0x77]
    %v243 = vld [vmem:[#allocation2 + $0x548] sm:$0x77]
    %v244 = vld [vmem:[%s3] sm:$0xf]
    %v246 = vperm.slane %v244, 0
    %v247 = vperm.slane %v244, 1
    %v248 = vperm.slane %v244, 2
    %v249 = vperm.slane %v244, 3
    %v424 = vunpack.c.l.b16 %v74
    %v425 = vunpack.c.h.b16 %v74
    %v426 = vunpack.c.l.b16 %v75
    %v427 = vunpack.c.h.b16 %v75
    %v428 = vunpack.c.l.b16 %v76
    %v429 = vunpack.c.h.b16 %v76
    %v430 = vunpack.c.l.b16 %v77
    %v431 = vunpack.c.h.b16 %v77
    %v432 = vunpack.c.l.b16 %v78
    %v433 = vunpack.c.h.b16 %v78
    %v434 = vunpack.c.l.b16 %v79
    %v435 = vunpack.c.h.b16 %v79
    %v436 = vunpack.c.l.b16 %v80
    %v437 = vunpack.c.h.b16 %v80
    %v438 = vunpack.c.l.b16 %v81
    %v439 = vunpack.c.h.b16 %v81
    %v440 = vunpack.c.l.b16 %v82
    %v441 = vunpack.c.h.b16 %v82
    %v442 = vunpack.c.l.b16 %v83
    %v443 = vunpack.c.h.b16 %v83
    %v444 = vunpack.c.l.b16 %v84
    %v445 = vunpack.c.h.b16 %v84
    %v446 = vunpack.c.l.b16 %v85
    %v447 = vunpack.c.h.b16 %v85
    %v448 = vunpack.c.l.b16 %v86
    %v449 = vunpack.c.h.b16 %v86
    %v450 = vunpack.c.l.b16 %v87
    %v451 = vunpack.c.h.b16 %v87
    %v452 = vunpack.c.l.b16 %v88
    %v453 = vunpack.c.h.b16 %v88
    %v454 = vunpack.c.l.b16 %v89
    %v455 = vunpack.c.h.b16 %v89
    %v456 = vunpack.c.l.b16 %v90
    %v457 = vunpack.c.h.b16 %v90
    %v458 = vunpack.c.l.b16 %v91
    %v459 = vunpack.c.h.b16 %v91
    %v460 = vunpack.c.l.b16 %v92
    %v461 = vunpack.c.h.b16 %v92
    %v462 = vunpack.c.l.b16 %v93
    %v463 = vunpack.c.h.b16 %v93
    %v464 = vunpack.c.l.b16 %v94
    %v465 = vunpack.c.h.b16 %v94
    %v466 = vunpack.c.l.b16 %v95
    %v467 = vunpack.c.h.b16 %v95
    %v468 = vunpack.c.l.b16 %v96
    %v469 = vunpack.c.h.b16 %v96
    %v470 = vunpack.c.l.b16 %v97
    %v471 = vunpack.c.h.b16 %v97
    %v472 = vunpack.c.l.b16 %v98
    %v473 = vunpack.c.h.b16 %v98
    %v474 = vunpack.c.l.b16 %v99
    %v475 = vunpack.c.h.b16 %v99
    %v476 = vunpack.c.l.b16 %v100
    %v477 = vunpack.c.h.b16 %v100
    %v478 = vunpack.c.l.b16 %v101
    %v479 = vunpack.c.h.b16 %v101
    %v480 = vunpack.c.l.b16 %v102
    %v481 = vunpack.c.h.b16 %v102
    %v482 = vunpack.c.l.b16 %v103
    %v483 = vunpack.c.h.b16 %v103
    %v484 = vunpack.c.l.b16 %v104
    %v485 = vunpack.c.h.b16 %v104
    %v486 = vunpack.c.l.b16 %v105
    %v487 = vunpack.c.h.b16 %v105
    %v488 = vunpack.c.l.b16 %v106
    %v489 = vunpack.c.h.b16 %v106
    %v490 = vunpack.c.l.b16 %v107
    %v491 = vunpack.c.h.b16 %v107
    %v492 = vunpack.c.l.b16 %v108
    %v493 = vunpack.c.h.b16 %v108
    %v494 = vunpack.c.l.b16 %v109
    %v495 = vunpack.c.h.b16 %v109
    %v496 = vunpack.c.l.b16 %v110
    %v497 = vunpack.c.h.b16 %v110
    %v498 = vunpack.c.l.b16 %v111
    %v499 = vunpack.c.h.b16 %v111
    %v500 = vunpack.c.l.b16 %v112
    %v501 = vunpack.c.h.b16 %v112
    %v502 = vunpack.c.l.b16 %v113
    %v503 = vunpack.c.h.b16 %v113
    %v504 = vunpack.c.l.b16 %v114
    %v505 = vunpack.c.h.b16 %v114
    %v506 = vunpack.c.l.b16 %v115
    %v507 = vunpack.c.h.b16 %v115
    %v508 = vunpack.c.l.b16 %v116
    %v509 = vunpack.c.h.b16 %v116
    %v510 = vunpack.c.l.b16 %v117
    %v511 = vunpack.c.h.b16 %v117
    %v512 = vunpack.c.l.b16 %v118
    %v513 = vunpack.c.h.b16 %v118
    %v514 = vunpack.c.l.b16 %v119
    %v515 = vunpack.c.h.b16 %v119
    %v516 = vunpack.c.l.b16 %v120
    %v517 = vunpack.c.h.b16 %v120
    %v518 = vunpack.c.l.b16 %v121
    %v519 = vunpack.c.h.b16 %v121
    %v520 = vunpack.c.l.b16 %v122
    %v521 = vunpack.c.h.b16 %v122
    %v522 = vunpack.c.l.b16 %v123
    %v523 = vunpack.c.h.b16 %v123
    %v524 = vunpack.c.l.b16 %v124
    %v525 = vunpack.c.h.b16 %v124
    %v526 = vunpack.c.l.b16 %v125
    %v527 = vunpack.c.h.b16 %v125
    %v528 = vunpack.c.l.b16 %v126
    %v529 = vunpack.c.h.b16 %v126
    %v530 = vunpack.c.l.b16 %v127
    %v531 = vunpack.c.h.b16 %v127
    %v532 = vunpack.c.l.b16 %v128
    %v533 = vunpack.c.h.b16 %v128
    %v534 = vunpack.c.l.b16 %v129
    %v535 = vunpack.c.h.b16 %v129
    %v536 = vunpack.c.l.b16 %v130
    %v537 = vunpack.c.h.b16 %v130
    %v538 = vunpack.c.l.b16 %v131
    %v539 = vunpack.c.h.b16 %v131
    %v540 = vunpack.c.l.b16 %v132
    %v541 = vunpack.c.h.b16 %v132
    %v542 = vunpack.c.l.b16 %v133
    %v543 = vunpack.c.h.b16 %v133
    %v544 = vunpack.c.l.b16 %v134
    %v545 = vunpack.c.h.b16 %v134
    %v546 = vunpack.c.l.b16 %v135
    %v547 = vunpack.c.h.b16 %v135
    %v548 = vunpack.c.l.b16 %v136
    %v549 = vunpack.c.h.b16 %v136
    %v550 = vunpack.c.l.b16 %v137
    %v551 = vunpack.c.h.b16 %v137
    %v552 = vunpack.c.l.b16 %v138
    %v553 = vunpack.c.h.b16 %v138
    %v554 = vunpack.c.l.b16 %v139
    %v555 = vunpack.c.h.b16 %v139
    %v556 = vunpack.c.l.b16 %v140
    %v557 = vunpack.c.h.b16 %v140
    %v558 = vunpack.c.l.b16 %v141
    %v559 = vunpack.c.h.b16 %v141
    %v560 = vunpack.c.l.b16 %v142
    %v561 = vunpack.c.h.b16 %v142
    %v562 = vunpack.c.l.b16 %v143
    %v563 = vunpack.c.h.b16 %v143
    %v564 = vunpack.c.l.b16 %v144
    %v565 = vunpack.c.h.b16 %v144
    %v566 = vunpack.c.l.b16 %v145
    %v567 = vunpack.c.h.b16 %v145
    %v568 = vunpack.c.l.b16 %v146
    %v569 = vunpack.c.h.b16 %v146
    %v570 = vunpack.c.l.b16 %v147
    %v571 = vunpack.c.h.b16 %v147
    %v572 = vunpack.c.l.b16 %v148
    %v573 = vunpack.c.h.b16 %v148
    %v574 = vunpack.c.l.b16 %v149
    %v575 = vunpack.c.h.b16 %v149
    %v576 = vunpack.c.l.b16 %v150
    %v577 = vunpack.c.h.b16 %v150
    %v578 = vunpack.c.l.b16 %v151
    %v579 = vunpack.c.h.b16 %v151
    %v580 = vunpack.c.l.b16 %v152
    %v581 = vunpack.c.h.b16 %v152
    %v582 = vunpack.c.l.b16 %v153
    %v583 = vunpack.c.h.b16 %v153
    %v584 = vunpack.c.l.b16 %v154
    %v585 = vunpack.c.h.b16 %v154
    %v586 = vunpack.c.l.b16 %v155
    %v587 = vunpack.c.h.b16 %v155
    %v588 = vunpack.c.l.b16 %v156
    %v589 = vunpack.c.h.b16 %v156
    %v590 = vunpack.c.l.b16 %v157
    %v591 = vunpack.c.h.b16 %v157
    %v592 = vunpack.c.l.b16 %v158
    %v593 = vunpack.c.h.b16 %v158
    %v594 = vunpack.c.l.b16 %v159
    %v595 = vunpack.c.h.b16 %v159
    %v596 = vunpack.c.l.b16 %v160
    %v597 = vunpack.c.h.b16 %v160
    %v598 = vunpack.c.l.b16 %v161
    %v599 = vunpack.c.h.b16 %v161
    %v600 = vunpack.c.l.b16 %v162
    %v601 = vunpack.c.h.b16 %v162
    %v602 = vunpack.c.l.b16 %v163
    %v603 = vunpack.c.h.b16 %v163
    %v604 = vunpack.c.l.b16 %v164
    %v605 = vunpack.c.h.b16 %v164
    %v606 = vunpack.c.l.b16 %v165
    %v607 = vunpack.c.h.b16 %v165
    %v608 = vunpack.c.l.b16 %v166
    %v609 = vunpack.c.h.b16 %v166
    %v610 = vunpack.c.l.b16 %v167
    %v611 = vunpack.c.h.b16 %v167
    %v612 = vunpack.c.l.b16 %v168
    %v613 = vunpack.c.h.b16 %v168
    %v614 = vunpack.c.l.b16 %v169
    %v615 = vunpack.c.h.b16 %v169
    %v616 = vunpack.c.l.b16 %v170
    %v617 = vunpack.c.h.b16 %v170
    %v618 = vunpack.c.l.b16 %v171
    %v619 = vunpack.c.h.b16 %v171
    %v620 = vunpack.c.l.b16 %v172
    %v621 = vunpack.c.h.b16 %v172
    %v622 = vunpack.c.l.b16 %v173
    %v623 = vunpack.c.h.b16 %v173
    %v624 = vunpack.c.l.b16 %v174
    %v625 = vunpack.c.h.b16 %v174
    %v626 = vunpack.c.l.b16 %v175
    %v627 = vunpack.c.h.b16 %v175
    %v628 = vunpack.c.l.b16 %v176
    %v629 = vunpack.c.h.b16 %v176
    %v630 = vunpack.c.l.b16 %v177
    %v631 = vunpack.c.h.b16 %v177
    %v632 = vunpack.c.l.b16 %v178
    %v633 = vunpack.c.h.b16 %v178
    %v634 = vunpack.c.l.b16 %v179
    %v635 = vunpack.c.h.b16 %v179
    %v636 = vunpack.c.l.b16 %v180
    %v637 = vunpack.c.h.b16 %v180
    %v638 = vunpack.c.l.b16 %v181
    %v639 = vunpack.c.h.b16 %v181
    %v640 = vunpack.c.l.b16 %v182
    %v641 = vunpack.c.h.b16 %v182
    %v642 = vunpack.c.l.b16 %v183
    %v643 = vunpack.c.h.b16 %v183
    %v644 = vunpack.c.l.b16 %v184
    %v645 = vunpack.c.h.b16 %v184
    %v646 = vunpack.c.l.b16 %v185
    %v647 = vunpack.c.h.b16 %v185
    %v648 = vunpack.c.l.b16 %v186
    %v649 = vunpack.c.h.b16 %v186
    %v650 = vunpack.c.l.b16 %v187
    %v651 = vunpack.c.h.b16 %v187
    %v652 = vunpack.c.l.b16 %v188
    %v653 = vunpack.c.h.b16 %v188
    %v654 = vunpack.c.l.b16 %v189
    %v655 = vunpack.c.h.b16 %v189
    %v656 = vunpack.c.l.b16 %v190
    %v657 = vunpack.c.h.b16 %v190
    %v658 = vunpack.c.l.b16 %v191
    %v659 = vunpack.c.h.b16 %v191
    %v660 = vunpack.c.l.b16 %v192
    %v661 = vunpack.c.h.b16 %v192
    %v662 = vunpack.c.l.b16 %v193
    %v663 = vunpack.c.h.b16 %v193
    %v664 = vunpack.c.l.b16 %v194
    %v665 = vunpack.c.h.b16 %v194
    %v666 = vunpack.c.l.b16 %v195
    %v667 = vunpack.c.h.b16 %v195
    %v668 = vunpack.c.l.b16 %v196
    %v669 = vunpack.c.h.b16 %v196
    %v670 = vunpack.c.l.b16 %v197
    %v671 = vunpack.c.h.b16 %v197
    %v672 = vunpack.c.l.b16 %v198
    %v673 = vunpack.c.h.b16 %v198
    %v674 = vunpack.c.l.b16 %v199
    %v675 = vunpack.c.h.b16 %v199
    %v676 = vunpack.c.l.b16 %v200
    %v677 = vunpack.c.h.b16 %v200
    %v678 = vunpack.c.l.b16 %v201
    %v679 = vunpack.c.h.b16 %v201
    %v680 = vunpack.c.l.b16 %v202
    %v681 = vunpack.c.h.b16 %v202
    %v682 = vunpack.c.l.b16 %v203
    %v683 = vunpack.c.h.b16 %v203
    %v684 = vunpack.c.l.b16 %v204
    %v685 = vunpack.c.h.b16 %v204
    %v686 = vunpack.c.l.b16 %v205
    %v687 = vunpack.c.h.b16 %v205
    %v688 = vunpack.c.l.b16 %v206
    %v689 = vunpack.c.h.b16 %v206
    %v690 = vunpack.c.l.b16 %v207
    %v691 = vunpack.c.h.b16 %v207
    %v692 = vunpack.c.l.b16 %v208
    %v693 = vunpack.c.h.b16 %v208
    %v694 = vunpack.c.l.b16 %v209
    %v695 = vunpack.c.h.b16 %v209
    %v696 = vunpack.c.l.b16 %v210
    %v697 = vunpack.c.h.b16 %v210
    %v698 = vunpack.c.l.b16 %v211
    %v699 = vunpack.c.h.b16 %v211
    %v700 = vunpack.c.l.b16 %v212
    %v701 = vunpack.c.h.b16 %v212
    %v702 = vunpack.c.l.b16 %v213
    %v703 = vunpack.c.h.b16 %v213
    %v704 = vunpack.c.l.b16 %v214
    %v705 = vunpack.c.h.b16 %v214
    %v706 = vunpack.c.l.b16 %v215
    %v707 = vunpack.c.h.b16 %v215
    %v708 = vunpack.c.l.b16 %v216
    %v709 = vunpack.c.h.b16 %v216
    %v710 = vunpack.c.l.b16 %v217
    %v711 = vunpack.c.h.b16 %v217
    %v712 = vunpack.c.l.b16 %v218
    %v713 = vunpack.c.h.b16 %v218
    %v714 = vunpack.c.l.b16 %v219
    %v715 = vunpack.c.h.b16 %v219
    %v716 = vunpack.c.l.b16 %v220
    %v717 = vunpack.c.h.b16 %v220
    %v718 = vunpack.c.l.b16 %v221
    %v719 = vunpack.c.h.b16 %v221
    %v720 = vunpack.c.l.b16 %v222
    %v721 = vunpack.c.h.b16 %v222
    %v722 = vunpack.c.l.b16 %v223
    %v723 = vunpack.c.h.b16 %v223
    %v724 = vunpack.c.l.b16 %v224
    %v725 = vunpack.c.h.b16 %v224
    %v726 = vunpack.c.l.b16 %v225
    %v727 = vunpack.c.h.b16 %v225
    %v728 = vunpack.c.l.b16 %v226
    %v729 = vunpack.c.h.b16 %v226
    %v730 = vunpack.c.l.b16 %v227
    %v731 = vunpack.c.h.b16 %v227
    %v732 = vunpack.c.l.b16 %v228
    %v733 = vunpack.c.h.b16 %v228
    %v734 = vunpack.c.l.b16 %v229
    %v735 = vunpack.c.h.b16 %v229
    %v736 = vunpack.c.l.b16 %v230
    %v737 = vunpack.c.h.b16 %v230
    %v738 = vunpack.c.l.b16 %v231
    %v739 = vunpack.c.h.b16 %v231
    %v740 = vunpack.c.l.b16 %v232
    %v741 = vunpack.c.h.b16 %v232
    %v742 = vunpack.c.l.b16 %v233
    %v743 = vunpack.c.h.b16 %v233
    %v744 = vunpack.c.l.b16 %v234
    %v745 = vunpack.c.h.b16 %v234
    %v746 = vunpack.c.l.b16 %v235
    %v747 = vunpack.c.h.b16 %v235
    %v748 = vunpack.c.l.b16 %v236
    %v749 = vunpack.c.h.b16 %v236
    %v750 = vunpack.c.l.b16 %v237
    %v751 = vunpack.c.h.b16 %v237
    %v752 = vunpack.c.l.b16 %v238
    %v753 = vunpack.c.h.b16 %v238
    %v754 = vunpack.c.l.b16 %v239
    %v755 = vunpack.c.h.b16 %v239
    %v756 = vunpack.c.l.b16 %v240
    %v757 = vunpack.c.h.b16 %v240
    %v758 = vunpack.c.l.b16 %v241
    %v759 = vunpack.c.h.b16 %v241
    %v760 = vunpack.c.l.b16 %v242
    %v761 = vunpack.c.h.b16 %v242
    %v762 = vunpack.c.l.b16 %v243
    %v763 = vunpack.c.h.b16 %v243
    %v764 = vpack.c.b16 %v428, %v424
    %v765 = vpack.c.b16 %v429, %v425
    %v766 = vpack.c.b16 %v430, %v426
    %v767 = vpack.c.b16 %v431, %v427
    %v768 = vpack.c.b16 %v436, %v432
    %v769 = vpack.c.b16 %v437, %v433
    %v770 = vpack.c.b16 %v438, %v434
    %v771 = vpack.c.b16 %v439, %v435
    %v772 = vpack.c.b16 %v444, %v440
    %v773 = vpack.c.b16 %v445, %v441
    %v774 = vpack.c.b16 %v446, %v442
    %v775 = vpack.c.b16 %v447, %v443
    %v776 = vpack.c.b16 %v452, %v448
    %v777 = vpack.c.b16 %v453, %v449
    %v778 = vpack.c.b16 %v454, %v450
    %v779 = vpack.c.b16 %v455, %v451
    %v780 = vpack.c.b16 %v460, %v456
    %v781 = vpack.c.b16 %v461, %v457
    %v782 = vpack.c.b16 %v462, %v458
    %v783 = vpack.c.b16 %v463, %v459
    %v784 = vpack.c.b16 %v468, %v464
    %v785 = vpack.c.b16 %v469, %v465
    %v786 = vpack.c.b16 %v470, %v466
    %v787 = vpack.c.b16 %v471, %v467
    %v788 = vpack.c.b16 %v476, %v472
    %v789 = vpack.c.b16 %v477, %v473
    %v790 = vpack.c.b16 %v478, %v474
    %v791 = vpack.c.b16 %v479, %v475
    %v792 = vpack.c.b16 %v484, %v480
    %v793 = vpack.c.b16 %v485, %v481
    %v794 = vpack.c.b16 %v486, %v482
    %v795 = vpack.c.b16 %v487, %v483
    %v796 = vpack.c.b16 %v492, %v488
    %v797 = vpack.c.b16 %v493, %v489
    %v798 = vpack.c.b16 %v494, %v490
    %v799 = vpack.c.b16 %v495, %v491
    %v800 = vpack.c.b16 %v500, %v496
    %v801 = vpack.c.b16 %v501, %v497
    %v802 = vpack.c.b16 %v502, %v498
    %v803 = vpack.c.b16 %v503, %v499
    %v804 = vpack.c.b16 %v508, %v504
    %v805 = vpack.c.b16 %v509, %v505
    %v806 = vpack.c.b16 %v510, %v506
    %v807 = vpack.c.b16 %v511, %v507
    %v808 = vpack.c.b16 %v516, %v512
    %v809 = vpack.c.b16 %v517, %v513
    %v810 = vpack.c.b16 %v518, %v514
    %v811 = vpack.c.b16 %v519, %v515
    %v812 = vpack.c.b16 %v524, %v520
    %v813 = vpack.c.b16 %v525, %v521
    %v814 = vpack.c.b16 %v526, %v522
    %v815 = vpack.c.b16 %v527, %v523
    %v816 = vpack.c.b16 %v532, %v528
    %v817 = vpack.c.b16 %v533, %v529
    %v818 = vpack.c.b16 %v534, %v530
    %v819 = vpack.c.b16 %v535, %v531
    %v820 = vpack.c.b16 %v540, %v536
    %v821 = vpack.c.b16 %v541, %v537
    %v822 = vpack.c.b16 %v542, %v538
    %v823 = vpack.c.b16 %v543, %v539
    %v824 = vpack.c.b16 %v548, %v544
    %v825 = vpack.c.b16 %v549, %v545
    %v826 = vpack.c.b16 %v550, %v546
    %v827 = vpack.c.b16 %v551, %v547
    %v828 = vpack.c.b16 %v556, %v552
    %v829 = vpack.c.b16 %v557, %v553
    %v830 = vpack.c.b16 %v558, %v554
    %v831 = vpack.c.b16 %v559, %v555
    %v832 = vpack.c.b16 %v564, %v560
    %v833 = vpack.c.b16 %v565, %v561
    %v834 = vpack.c.b16 %v566, %v562
    %v835 = vpack.c.b16 %v567, %v563
    %v836 = vpack.c.b16 %v572, %v568
    %v837 = vpack.c.b16 %v573, %v569
    %v838 = vpack.c.b16 %v574, %v570
    %v839 = vpack.c.b16 %v575, %v571
    %v840 = vpack.c.b16 %v580, %v576
    %v841 = vpack.c.b16 %v581, %v577
    %v842 = vpack.c.b16 %v582, %v578
    %v843 = vpack.c.b16 %v583, %v579
    %v844 = vpack.c.b16 %v588, %v584
    %v845 = vpack.c.b16 %v589, %v585
    %v846 = vpack.c.b16 %v590, %v586
    %v847 = vpack.c.b16 %v591, %v587
    %v848 = vpack.c.b16 %v596, %v592
    %v849 = vpack.c.b16 %v597, %v593
    %v850 = vpack.c.b16 %v598, %v594
    %v851 = vpack.c.b16 %v599, %v595
    %v852 = vpack.c.b16 %v604, %v600
    %v853 = vpack.c.b16 %v605, %v601
    %v854 = vpack.c.b16 %v606, %v602
    %v855 = vpack.c.b16 %v607, %v603
    %v856 = vpack.c.b16 %v612, %v608
    %v857 = vpack.c.b16 %v613, %v609
    %v858 = vpack.c.b16 %v614, %v610
    %v859 = vpack.c.b16 %v615, %v611
    %v860 = vpack.c.b16 %v620, %v616
    %v861 = vpack.c.b16 %v621, %v617
    %v862 = vpack.c.b16 %v622, %v618
    %v863 = vpack.c.b16 %v623, %v619
    %v864 = vpack.c.b16 %v628, %v624
    %v865 = vpack.c.b16 %v629, %v625
    %v866 = vpack.c.b16 %v630, %v626
    %v867 = vpack.c.b16 %v631, %v627
    %v868 = vpack.c.b16 %v636, %v632
    %v869 = vpack.c.b16 %v637, %v633
    %v870 = vpack.c.b16 %v638, %v634
    %v871 = vpack.c.b16 %v639, %v635
    %v872 = vpack.c.b16 %v644, %v640
    %v873 = vpack.c.b16 %v645, %v641
    %v874 = vpack.c.b16 %v646, %v642
    %v875 = vpack.c.b16 %v647, %v643
    %v876 = vpack.c.b16 %v652, %v648
    %v877 = vpack.c.b16 %v653, %v649
    %v878 = vpack.c.b16 %v654, %v650
    %v879 = vpack.c.b16 %v655, %v651
    %v880 = vpack.c.b16 %v660, %v656
    %v881 = vpack.c.b16 %v661, %v657
    %v882 = vpack.c.b16 %v662, %v658
    %v883 = vpack.c.b16 %v663, %v659
    %v884 = vpack.c.b16 %v668, %v664
    %v885 = vpack.c.b16 %v669, %v665
    %v886 = vpack.c.b16 %v670, %v666
    %v887 = vpack.c.b16 %v671, %v667
    %v888 = vpack.c.b16 %v676, %v672
    %v889 = vpack.c.b16 %v677, %v673
    %v890 = vpack.c.b16 %v678, %v674
    %v891 = vpack.c.b16 %v679, %v675
    %v892 = vpack.c.b16 %v684, %v680
    %v893 = vpack.c.b16 %v685, %v681
    %v894 = vpack.c.b16 %v686, %v682
    %v895 = vpack.c.b16 %v687, %v683
    %v896 = vpack.c.b16 %v692, %v688
    %v897 = vpack.c.b16 %v693, %v689
    %v898 = vpack.c.b16 %v694, %v690
    %v899 = vpack.c.b16 %v695, %v691
    %v900 = vpack.c.b16 %v700, %v696
    %v901 = vpack.c.b16 %v701, %v697
    %v902 = vpack.c.b16 %v702, %v698
    %v903 = vpack.c.b16 %v703, %v699
    %v904 = vpack.c.b16 %v708, %v704
    %v905 = vpack.c.b16 %v709, %v705
    %v906 = vpack.c.b16 %v710, %v706
    %v907 = vpack.c.b16 %v711, %v707
    %v908 = vpack.c.b16 %v716, %v712
    %v909 = vpack.c.b16 %v717, %v713
    %v910 = vpack.c.b16 %v718, %v714
    %v911 = vpack.c.b16 %v719, %v715
    %v912 = vpack.c.b16 %v724, %v720
    %v913 = vpack.c.b16 %v725, %v721
    %v914 = vpack.c.b16 %v726, %v722
    %v915 = vpack.c.b16 %v727, %v723
    %v916 = vpack.c.b16 %v732, %v728
    %v917 = vpack.c.b16 %v733, %v729
    %v918 = vpack.c.b16 %v734, %v730
    %v919 = vpack.c.b16 %v735, %v731
    %v920 = vpack.c.b16 %v740, %v736
    %v921 = vpack.c.b16 %v741, %v737
    %v922 = vpack.c.b16 %v742, %v738
    %v923 = vpack.c.b16 %v743, %v739
    %v924 = vpack.c.b16 %v748, %v744
    %v925 = vpack.c.b16 %v749, %v745
    %v926 = vpack.c.b16 %v750, %v746
    %v927 = vpack.c.b16 %v751, %v747
    %v928 = vpack.c.b16 %v756, %v752
    %v929 = vpack.c.b16 %v757, %v753
    %v930 = vpack.c.b16 %v758, %v754
    %v931 = vpack.c.b16 %v759, %v755
    %v932 = vpack.c.b16 %v760, %v760
    %v933 = vpack.c.b16 %v761, %v761
    %v934 = vpack.c.b16 %v762, %v762
    %v935 = vpack.c.b16 %v763, %v763
    %vm1104 = vcmask 310272
    %v1106 = vsel %vm1104, %v73, 0
    %vm1108 = vcmask 1042432
    %v1110 = vsel %vm1108, %v932, 0
    %v1113 = vsel %vm1108, %v933, 0
    %v1116 = vsel %vm1108, %v934, 0
    %v1119 = vsel %vm1108, %v935, 0
    %1121 = vmatpush.bf16.msra.mxu0 %v792
    %1122 = vmatpush.bf16.msra.mxu0 %v788
    %1123 = vmatpush.bf16.msra.mxu0 %v784
    %1124 = vmatpush.bf16.msra.mxu0 %v780
    %1125 = vmatpush.bf16.msra.mxu0 %v776
    %1126 = vmatpush.bf16.msra.mxu0 %v772
    %1127 = vmatpush.bf16.msra.mxu0 %v768
    %1128 = vmatpush.bf16.msra.mxu0 %v764
    %1129 = vmatmul.bf16.gmra.mxu0 %v68
    %v1130 = vpop.f32.mrf.mxu0
    %v1131 = vadd.f32 %v246, %v1130
    %v1132 = vpop.f32.mrf.mxu0
    %1133 = vdwg.mxu0
    %1134 = vmatpush.bf16.msra.mxu0 %v824
    %1135 = vmatpush.bf16.msra.mxu0 %v820
    %1136 = vmatpush.bf16.msra.mxu0 %v816
    %1137 = vmatpush.bf16.msra.mxu0 %v812
    %1138 = vmatpush.bf16.msra.mxu0 %v808
    %1139 = vmatpush.bf16.msra.mxu0 %v804
    %1140 = vmatpush.bf16.msra.mxu0 %v800
    %1141 = vmatpush.bf16.msra.mxu0 %v796
    %1142 = vmatmul.bf16.gmra.mxu0 %v69
    %v1143 = vpop.f32.mrf.mxu0
    %v1144 = vadd.f32 %v1131, %v1143
    %v1145 = vpop.f32.mrf.mxu0
    %1146 = vdwg.mxu0
    %1147 = vmatpush.bf16.msra.mxu0 %v856
    %1148 = vmatpush.bf16.msra.mxu0 %v852
    %1149 = vmatpush.bf16.msra.mxu0 %v848
    %1150 = vmatpush.bf16.msra.mxu0 %v844
    %1151 = vmatpush.bf16.msra.mxu0 %v840
    %1152 = vmatpush.bf16.msra.mxu0 %v836
    %1153 = vmatpush.bf16.msra.mxu0 %v832
    %1154 = vmatpush.bf16.msra.mxu0 %v828
    %1155 = vmatmul.bf16.gmra.mxu0 %v70
    %v1156 = vpop.f32.mrf.mxu0
    %v1157 = vadd.f32 %v1144, %v1156
    %v1158 = vpop.f32.mrf.mxu0
    %1159 = vdwg.mxu0
    %1160 = vmatpush.bf16.msra.mxu0 %v888
    %1161 = vmatpush.bf16.msra.mxu0 %v884
    %1162 = vmatpush.bf16.msra.mxu0 %v880
    %1163 = vmatpush.bf16.msra.mxu0 %v876
    %1164 = vmatpush.bf16.msra.mxu0 %v872
    %1165 = vmatpush.bf16.msra.mxu0 %v868
    %1166 = vmatpush.bf16.msra.mxu0 %v864
    %1167 = vmatpush.bf16.msra.mxu0 %v860
    %1168 = vmatmul.bf16.gmra.mxu0 %v71
    %v1169 = vpop.f32.mrf.mxu0
    %v1170 = vadd.f32 %v1157, %v1169
    %v1171 = vpop.f32.mrf.mxu0
    %1172 = vdwg.mxu0
    %1173 = vmatpush.bf16.msra.mxu0 %v920
    %1174 = vmatpush.bf16.msra.mxu0 %v916
    %1175 = vmatpush.bf16.msra.mxu0 %v912
    %1176 = vmatpush.bf16.msra.mxu0 %v908
    %1177 = vmatpush.bf16.msra.mxu0 %v904
    %1178 = vmatpush.bf16.msra.mxu0 %v900
    %1179 = vmatpush.bf16.msra.mxu0 %v896
    %1180 = vmatpush.bf16.msra.mxu0 %v892
    %1181 = vmatmul.bf16.gmra.mxu0 %v72
    %v1182 = vpop.f32.mrf.mxu0
    %v1183 = vadd.f32 %v1170, %v1182
    %v1184 = vpop.f32.mrf.mxu0
    %1185 = vdwg.mxu0
    %1186 = vmatpush.bf16.msra.mxu0 0
    %1187 = vmatpush.bf16.msra.mxu0 0
    %1188 = vmatpush.bf16.msra.mxu0 0
    %1189 = vmatpush.bf16.msra.mxu0 0
    %1190 = vmatpush.bf16.msra.mxu0 0
    %1191 = vmatpush.bf16.msra.mxu0 %v1110
    %1192 = vmatpush.bf16.msra.mxu0 %v928
    %1193 = vmatpush.bf16.msra.mxu0 %v924
    %1194 = vmatmul.bf16.gmra.mxu0 %v1106
    %v1195 = vpop.f32.mrf.mxu0
    %v1196 = vadd.f32 %v1183, %v1195
    %v1197 = vpop.f32.mrf.mxu0
    %1198 = vdwg.mxu0
    %1199 = vmatpush.bf16.msra.mxu0 %v793
    %1200 = vmatpush.bf16.msra.mxu0 %v789
    %1201 = vmatpush.bf16.msra.mxu0 %v785
    %1202 = vmatpush.bf16.msra.mxu0 %v781
    %1203 = vmatpush.bf16.msra.mxu0 %v777
    %1204 = vmatpush.bf16.msra.mxu0 %v773
    %1205 = vmatpush.bf16.msra.mxu0 %v769
    %1206 = vmatpush.bf16.msra.mxu0 %v765
    %1207 = vmatmul.bf16.gmra.mxu0 %v68
    %v1208 = vpop.f32.mrf.mxu0
    %v1209 = vadd.f32 %v247, %v1208
    %v1210 = vpop.f32.mrf.mxu0
    %1211 = vdwg.mxu0
    %1212 = vmatpush.bf16.msra.mxu0 %v825
    %1213 = vmatpush.bf16.msra.mxu0 %v821
    %1214 = vmatpush.bf16.msra.mxu0 %v817
    %1215 = vmatpush.bf16.msra.mxu0 %v813
    %1216 = vmatpush.bf16.msra.mxu0 %v809
    %1217 = vmatpush.bf16.msra.mxu0 %v805
    %1218 = vmatpush.bf16.msra.mxu0 %v801
    %1219 = vmatpush.bf16.msra.mxu0 %v797
    %1220 = vmatmul.bf16.gmra.mxu0 %v69
    %v1221 = vpop.f32.mrf.mxu0
    %v1222 = vadd.f32 %v1209, %v1221
    %v1223 = vpop.f32.mrf.mxu0
    %1224 = vdwg.mxu0
    %1225 = vmatpush.bf16.msra.mxu0 %v857
    %1226 = vmatpush.bf16.msra.mxu0 %v853
    %1227 = vmatpush.bf16.msra.mxu0 %v849
    %1228 = vmatpush.bf16.msra.mxu0 %v845
    %1229 = vmatpush.bf16.msra.mxu0 %v841
    %1230 = vmatpush.bf16.msra.mxu0 %v837
    %1231 = vmatpush.bf16.msra.mxu0 %v833
    %1232 = vmatpush.bf16.msra.mxu0 %v829
    %1233 = vmatmul.bf16.gmra.mxu0 %v70
    %v1234 = vpop.f32.mrf.mxu0
    %v1235 = vadd.f32 %v1222, %v1234
    %v1236 = vpop.f32.mrf.mxu0
    %1237 = vdwg.mxu0
    %1238 = vmatpush.bf16.msra.mxu0 %v889
    %1239 = vmatpush.bf16.msra.mxu0 %v885
    %1240 = vmatpush.bf16.msra.mxu0 %v881
    %1241 = vmatpush.bf16.msra.mxu0 %v877
    %1242 = vmatpush.bf16.msra.mxu0 %v873
    %1243 = vmatpush.bf16.msra.mxu0 %v869
    %1244 = vmatpush.bf16.msra.mxu0 %v865
    %1245 = vmatpush.bf16.msra.mxu0 %v861
    %1246 = vmatmul.bf16.gmra.mxu0 %v71
    %v1247 = vpop.f32.mrf.mxu0
    %v1248 = vadd.f32 %v1235, %v1247
    %v1249 = vpop.f32.mrf.mxu0
    %1250 = vdwg.mxu0
    %1251 = vmatpush.bf16.msra.mxu0 %v921
    %1252 = vmatpush.bf16.msra.mxu0 %v917
    %1253 = vmatpush.bf16.msra.mxu0 %v913
    %1254 = vmatpush.bf16.msra.mxu0 %v909
    %1255 = vmatpush.bf16.msra.mxu0 %v905
    %1256 = vmatpush.bf16.msra.mxu0 %v901
    %1257 = vmatpush.bf16.msra.mxu0 %v897
    %1258 = vmatpush.bf16.msra.mxu0 %v893
    %1259 = vmatmul.bf16.gmra.mxu0 %v72
    %v1260 = vpop.f32.mrf.mxu0
    %v1261 = vadd.f32 %v1248, %v1260
    %v1262 = vpop.f32.mrf.mxu0
    %1263 = vdwg.mxu0
    %1264 = vmatpush.bf16.msra.mxu0 0
    %1265 = vmatpush.bf16.msra.mxu0 0
    %1266 = vmatpush.bf16.msra.mxu0 0
    %1267 = vmatpush.bf16.msra.mxu0 0
    %1268 = vmatpush.bf16.msra.mxu0 0
    %1269 = vmatpush.bf16.msra.mxu0 %v1113
    %1270 = vmatpush.bf16.msra.mxu0 %v929
    %1271 = vmatpush.bf16.msra.mxu0 %v925
    %1272 = vmatmul.bf16.gmra.mxu0 %v1106
    %v1273 = vpop.f32.mrf.mxu0
    %v1274 = vadd.f32 %v1261, %v1273
    %v1275 = vpop.f32.mrf.mxu0
    %1276 = vdwg.mxu0
    %1277 = vmatpush.bf16.msra.mxu0 %v794
    %1278 = vmatpush.bf16.msra.mxu0 %v790
    %1279 = vmatpush.bf16.msra.mxu0 %v786
    %1280 = vmatpush.bf16.msra.mxu0 %v782
    %1281 = vmatpush.bf16.msra.mxu0 %v778
    %1282 = vmatpush.bf16.msra.mxu0 %v774
    %1283 = vmatpush.bf16.msra.mxu0 %v770
    %1284 = vmatpush.bf16.msra.mxu0 %v766
    %1285 = vmatmul.bf16.gmra.mxu0 %v68
    %v1286 = vpop.f32.mrf.mxu0
    %v1287 = vadd.f32 %v248, %v1286
    %v1288 = vpop.f32.mrf.mxu0
    %1289 = vdwg.mxu0
    %1290 = vmatpush.bf16.msra.mxu0 %v826
    %1291 = vmatpush.bf16.msra.mxu0 %v822
    %1292 = vmatpush.bf16.msra.mxu0 %v818
    %1293 = vmatpush.bf16.msra.mxu0 %v814
    %1294 = vmatpush.bf16.msra.mxu0 %v810
    %1295 = vmatpush.bf16.msra.mxu0 %v806
    %1296 = vmatpush.bf16.msra.mxu0 %v802
    %1297 = vmatpush.bf16.msra.mxu0 %v798
    %1298 = vmatmul.bf16.gmra.mxu0 %v69
    %v1299 = vpop.f32.mrf.mxu0
    %v1300 = vadd.f32 %v1287, %v1299
    %v1301 = vpop.f32.mrf.mxu0
    %1302 = vdwg.mxu0
    %1303 = vmatpush.bf16.msra.mxu0 %v858
    %1304 = vmatpush.bf16.msra.mxu0 %v854
    %1305 = vmatpush.bf16.msra.mxu0 %v850
    %1306 = vmatpush.bf16.msra.mxu0 %v846
    %1307 = vmatpush.bf16.msra.mxu0 %v842
    %1308 = vmatpush.bf16.msra.mxu0 %v838
    %1309 = vmatpush.bf16.msra.mxu0 %v834
    %1310 = vmatpush.bf16.msra.mxu0 %v830
    %1311 = vmatmul.bf16.gmra.mxu0 %v70
    %v1312 = vpop.f32.mrf.mxu0
    %v1313 = vadd.f32 %v1300, %v1312
    %v1314 = vpop.f32.mrf.mxu0
    %1315 = vdwg.mxu0
    %1316 = vmatpush.bf16.msra.mxu0 %v890
    %1317 = vmatpush.bf16.msra.mxu0 %v886
    %1318 = vmatpush.bf16.msra.mxu0 %v882
    %1319 = vmatpush.bf16.msra.mxu0 %v878
    %1320 = vmatpush.bf16.msra.mxu0 %v874
    %1321 = vmatpush.bf16.msra.mxu0 %v870
    %1322 = vmatpush.bf16.msra.mxu0 %v866
    %1323 = vmatpush.bf16.msra.mxu0 %v862
    %1324 = vmatmul.bf16.gmra.mxu0 %v71
    %v1325 = vpop.f32.mrf.mxu0
    %v1326 = vadd.f32 %v1313, %v1325
    %v1327 = vpop.f32.mrf.mxu0
    %1328 = vdwg.mxu0
    %1329 = vmatpush.bf16.msra.mxu0 %v922
    %1330 = vmatpush.bf16.msra.mxu0 %v918
    %1331 = vmatpush.bf16.msra.mxu0 %v914
    %1332 = vmatpush.bf16.msra.mxu0 %v910
    %1333 = vmatpush.bf16.msra.mxu0 %v906
    %1334 = vmatpush.bf16.msra.mxu0 %v902
    %1335 = vmatpush.bf16.msra.mxu0 %v898
    %1336 = vmatpush.bf16.msra.mxu0 %v894
    %1337 = vmatmul.bf16.gmra.mxu0 %v72
    %v1338 = vpop.f32.mrf.mxu0
    %v1339 = vadd.f32 %v1326, %v1338
    %v1340 = vpop.f32.mrf.mxu0
    %1341 = vdwg.mxu0
    %1342 = vmatpush.bf16.msra.mxu0 0
    %1343 = vmatpush.bf16.msra.mxu0 0
    %1344 = vmatpush.bf16.msra.mxu0 0
    %1345 = vmatpush.bf16.msra.mxu0 0
    %1346 = vmatpush.bf16.msra.mxu0 0
    %1347 = vmatpush.bf16.msra.mxu0 %v1116
    %1348 = vmatpush.bf16.msra.mxu0 %v930
    %1349 = vmatpush.bf16.msra.mxu0 %v926
    %1350 = vmatmul.bf16.gmra.mxu0 %v1106
    %v1351 = vpop.f32.mrf.mxu0
    %v1352 = vadd.f32 %v1339, %v1351
    %v1353 = vpop.f32.mrf.mxu0
    %1354 = vdwg.mxu0
    %1355 = vmatpush.bf16.msra.mxu0 %v795
    %1356 = vmatpush.bf16.msra.mxu0 %v791
    %1357 = vmatpush.bf16.msra.mxu0 %v787
    %1358 = vmatpush.bf16.msra.mxu0 %v783
    %1359 = vmatpush.bf16.msra.mxu0 %v779
    %1360 = vmatpush.bf16.msra.mxu0 %v775
    %1361 = vmatpush.bf16.msra.mxu0 %v771
    %1362 = vmatpush.bf16.msra.mxu0 %v767
    %1363 = vmatmul.bf16.gmra.mxu0 %v68
    %v1364 = vpop.f32.mrf.mxu0
    %v1365 = vadd.f32 %v249, %v1364
    %v1366 = vpop.f32.mrf.mxu0
    %1367 = vdwg.mxu0
    %1368 = vmatpush.bf16.msra.mxu0 %v827
    %1369 = vmatpush.bf16.msra.mxu0 %v823
    %1370 = vmatpush.bf16.msra.mxu0 %v819
    %1371 = vmatpush.bf16.msra.mxu0 %v815
    %1372 = vmatpush.bf16.msra.mxu0 %v811
    %1373 = vmatpush.bf16.msra.mxu0 %v807
    %1374 = vmatpush.bf16.msra.mxu0 %v803
    %1375 = vmatpush.bf16.msra.mxu0 %v799
    %1376 = vmatmul.bf16.gmra.mxu0 %v69
    %v1377 = vpop.f32.mrf.mxu0
    %v1378 = vadd.f32 %v1365, %v1377
    %v1379 = vpop.f32.mrf.mxu0
    %1380 = vdwg.mxu0
    %1381 = vmatpush.bf16.msra.mxu0 %v859
    %1382 = vmatpush.bf16.msra.mxu0 %v855
    %1383 = vmatpush.bf16.msra.mxu0 %v851
    %1384 = vmatpush.bf16.msra.mxu0 %v847
    %1385 = vmatpush.bf16.msra.mxu0 %v843
    %1386 = vmatpush.bf16.msra.mxu0 %v839
    %1387 = vmatpush.bf16.msra.mxu0 %v835
    %1388 = vmatpush.bf16.msra.mxu0 %v831
    %1389 = vmatmul.bf16.gmra.mxu0 %v70
    %v1390 = vpop.f32.mrf.mxu0
    %v1391 = vadd.f32 %v1378, %v1390
    %v1392 = vpop.f32.mrf.mxu0
    %1393 = vdwg.mxu0
    %1394 = vmatpush.bf16.msra.mxu0 %v891
    %1395 = vmatpush.bf16.msra.mxu0 %v887
    %1396 = vmatpush.bf16.msra.mxu0 %v883
    %1397 = vmatpush.bf16.msra.mxu0 %v879
    %1398 = vmatpush.bf16.msra.mxu0 %v875
    %1399 = vmatpush.bf16.msra.mxu0 %v871
    %1400 = vmatpush.bf16.msra.mxu0 %v867
    %1401 = vmatpush.bf16.msra.mxu0 %v863
    %1402 = vmatmul.bf16.gmra.mxu0 %v71
    %v1403 = vpop.f32.mrf.mxu0
    %v1404 = vadd.f32 %v1391, %v1403
    %v1405 = vpop.f32.mrf.mxu0
    %1406 = vdwg.mxu0
    %1407 = vmatpush.bf16.msra.mxu0 %v923
    %1408 = vmatpush.bf16.msra.mxu0 %v919
    %1409 = vmatpush.bf16.msra.mxu0 %v915
    %1410 = vmatpush.bf16.msra.mxu0 %v911
    %1411 = vmatpush.bf16.msra.mxu0 %v907
    %1412 = vmatpush.bf16.msra.mxu0 %v903
    %1413 = vmatpush.bf16.msra.mxu0 %v899
    %1414 = vmatpush.bf16.msra.mxu0 %v895
    %1415 = vmatmul.bf16.gmra.mxu0 %v72
    %v1416 = vpop.f32.mrf.mxu0
    %v1417 = vadd.f32 %v1404, %v1416
    %v1418 = vpop.f32.mrf.mxu0
    %1419 = vdwg.mxu0
    %1420 = vmatpush.bf16.msra.mxu0 0
    %1421 = vmatpush.bf16.msra.mxu0 0
    %1422 = vmatpush.bf16.msra.mxu0 0
    %1423 = vmatpush.bf16.msra.mxu0 0
    %1424 = vmatpush.bf16.msra.mxu0 0
    %1425 = vmatpush.bf16.msra.mxu0 %v1119
    %1426 = vmatpush.bf16.msra.mxu0 %v931
    %1427 = vmatpush.bf16.msra.mxu0 %v927
    %1428 = vmatmul.bf16.gmra.mxu0 %v1106
    %v1429 = vpop.f32.mrf.mxu0
    %v1430 = vadd.f32 %v1417, %v1429
    %v1431 = vpop.f32.mrf.mxu0
    %1432 = vdwg.mxu0
    %v1433 = vmax.f32 %v1196, 0.0
    %v1434 = vmax.f32 %v1274, 0.0
    %v1435 = vmax.f32 %v1352, 0.0
    %v1436 = vmax.f32 %v1430, 0.0
    %v1437 = vpack.c.bf16 %v1433, %v1433
    %v1438 = vpack.c.bf16 %v1434, %v1434
    %v1439 = vpack.c.bf16 %v1435, %v1435
    %v1440 = vpack.c.bf16 %v1436, %v1436
    %v1441 = vld [vmem:[#allocation4] sm:$0xff]
    %v1442 = vld [vmem:[#allocation4 + $0x8] sm:$0xff]
    %v1443 = vld [vmem:[#allocation4 + $0x10] sm:$0xff]
    %v1444 = vld [vmem:[#allocation4 + $0x18] sm:$0xff]
    %v1445 = vld [vmem:[#allocation4 + $0x20] sm:$0xff]
    %v1446 = vld [vmem:[#allocation4 + $0x28] sm:$0xff]
    %v1447 = vld [vmem:[#allocation4 + $0x30] sm:$0xff]
    %v1448 = vld [vmem:[#allocation4 + $0x38] sm:$0xff]
    %v1449 = vld [vmem:[#allocation4 + $0x40] sm:$0xff]
    %v1450 = vld [vmem:[#allocation4 + $0x48] sm:$0xff]
    %v1451 = vld [vmem:[#allocation4 + $0x50] sm:$0xff]
    %v1452 = vld [vmem:[#allocation4 + $0x58] sm:$0xff]
    %v1453 = vld [vmem:[#allocation4 + $0x60] sm:$0xff]
    %v1454 = vld [vmem:[#allocation4 + $0x68] sm:$0xff]
    %v1455 = vld [vmem:[#allocation4 + $0x70] sm:$0xff]
    %v1456 = vld [vmem:[#allocation4 + $0x78] sm:$0xff]
    %v1457 = vld [vmem:[#allocation4 + $0x80] sm:$0xff]
    %v1458 = vld [vmem:[#allocation4 + $0x88] sm:$0xff]
    %v1459 = vld [vmem:[#allocation4 + $0x90] sm:$0xff]
    %v1460 = vld [vmem:[#allocation4 + $0x98] sm:$0xff]
    %v1461 = vld [vmem:[#allocation4 + $0xa0] sm:$0xff]
    %v1462 = vld [vmem:[#allocation4 + $0xa8] sm:$0xff]
    %v1463 = vld [vmem:[#allocation4 + $0xb0] sm:$0xff]
    %v1464 = vld [vmem:[#allocation4 + $0xb8] sm:$0xff]
    %v1465 = vld [vmem:[#allocation4 + $0xc0] sm:$0xff]
    %v1466 = vld [vmem:[#allocation4 + $0xc8] sm:$0xff]
    %v1467 = vld [vmem:[#allocation4 + $0xd0] sm:$0xff]
    %v1468 = vld [vmem:[#allocation4 + $0xd8] sm:$0xff]
    %v1469 = vld [vmem:[#allocation4 + $0xe0] sm:$0xff]
    %v1470 = vld [vmem:[#allocation4 + $0xe8] sm:$0xff]
    %v1471 = vld [vmem:[#allocation4 + $0xf0] sm:$0xff]
    %v1472 = vld [vmem:[#allocation4 + $0xf8] sm:$0xff]
    %v1473 = vld [vmem:[#allocation4 + $0x100] sm:$0xff]
    %v1474 = vld [vmem:[#allocation4 + $0x108] sm:$0xff]
    %v1475 = vld [vmem:[#allocation4 + $0x110] sm:$0xff]
    %v1476 = vld [vmem:[#allocation4 + $0x118] sm:$0xff]
    %v1477 = vld [vmem:[#allocation4 + $0x120] sm:$0xff]
    %v1478 = vld [vmem:[#allocation4 + $0x128] sm:$0xff]
    %v1479 = vld [vmem:[#allocation4 + $0x130] sm:$0xff]
    %v1480 = vld [vmem:[#allocation4 + $0x138] sm:$0xff]
    %v1481 = vld [vmem:[#allocation4 + $0x140] sm:$0xff]
    %v1482 = vld [vmem:[#allocation4 + $0x148] sm:$0xff]
    %v1483 = vld [vmem:[#allocation4 + $0x150] sm:$0xff]
    %v1484 = vld [vmem:[#allocation4 + $0x158] sm:$0xff]
    %v1485 = vld [vmem:[#allocation4 + $0x160] sm:$0xff]
    %v1486 = vld [vmem:[#allocation4 + $0x168] sm:$0xff]
    %v1487 = vld [vmem:[#allocation4 + $0x170] sm:$0xff]
    %v1488 = vld [vmem:[#allocation4 + $0x178] sm:$0xff]
    %v1489 = vld [vmem:[#allocation4 + $0x180] sm:$0xff]
    %v1490 = vld [vmem:[#allocation4 + $0x188] sm:$0xff]
    %v1491 = vld [vmem:[#allocation4 + $0x190] sm:$0xff]
    %v1492 = vld [vmem:[#allocation4 + $0x198] sm:$0xff]
    %v1493 = vld [vmem:[#allocation4 + $0x1a0] sm:$0xff]
    %v1494 = vld [vmem:[#allocation4 + $0x1a8] sm:$0xff]
    %v1495 = vld [vmem:[#allocation4 + $0x1b0] sm:$0xff]
    %v1496 = vld [vmem:[#allocation4 + $0x1b8] sm:$0xff]
    %v1497 = vld [vmem:[#allocation4 + $0x1c0] sm:$0xff]
    %v1498 = vld [vmem:[#allocation4 + $0x1c8] sm:$0xff]
    %v1499 = vld [vmem:[#allocation4 + $0x1d0] sm:$0xff]
    %v1500 = vld [vmem:[#allocation4 + $0x1d8] sm:$0xff]
    %v1501 = vld [vmem:[#allocation4 + $0x1e0] sm:$0xff]
    %v1502 = vld [vmem:[#allocation4 + $0x1e8] sm:$0xff]
    %v1503 = vld [vmem:[#allocation4 + $0x1f0] sm:$0xff]
    %v1504 = vld [vmem:[#allocation4 + $0x1f8] sm:$0xff]
    %v1505 = vld [vmem:[#allocation4 + $0x200] sm:$0xff]
    %v1506 = vld [vmem:[#allocation4 + $0x208] sm:$0xff]
    %v1507 = vld [vmem:[#allocation4 + $0x210] sm:$0xff]
    %v1508 = vld [vmem:[#allocation4 + $0x218] sm:$0xff]
    %v1509 = vld [vmem:[#allocation4 + $0x220] sm:$0xff]
    %v1510 = vld [vmem:[#allocation4 + $0x228] sm:$0xff]
    %v1511 = vld [vmem:[#allocation4 + $0x230] sm:$0xff]
    %v1512 = vld [vmem:[#allocation4 + $0x238] sm:$0xff]
    %v1513 = vld [vmem:[#allocation4 + $0x240] sm:$0xff]
    %v1514 = vld [vmem:[#allocation4 + $0x248] sm:$0xff]
    %v1515 = vld [vmem:[#allocation4 + $0x250] sm:$0xff]
    %v1516 = vld [vmem:[#allocation4 + $0x258] sm:$0xff]
    %v1517 = vld [vmem:[#allocation4 + $0x260] sm:$0xff]
    %v1518 = vld [vmem:[#allocation4 + $0x268] sm:$0xff]
    %v1519 = vld [vmem:[#allocation4 + $0x270] sm:$0xff]
    %v1520 = vld [vmem:[#allocation4 + $0x278] sm:$0xff]
    %v1521 = vld [vmem:[#allocation4 + $0x280] sm:$0xff]
    %v1522 = vld [vmem:[#allocation4 + $0x288] sm:$0xff]
    %v1523 = vld [vmem:[#allocation4 + $0x290] sm:$0xff]
    %v1524 = vld [vmem:[#allocation4 + $0x298] sm:$0xff]
    %v1525 = vld [vmem:[#allocation4 + $0x2a0] sm:$0xff]
    %v1526 = vld [vmem:[#allocation4 + $0x2a8] sm:$0xff]
    %v1527 = vld [vmem:[#allocation4 + $0x2b0] sm:$0xff]
    %v1528 = vld [vmem:[#allocation4 + $0x2b8] sm:$0xff]
    %v1529 = vld [vmem:[#allocation4 + $0x2c0] sm:$0xff]
    %v1530 = vld [vmem:[#allocation4 + $0x2c8] sm:$0xff]
    %v1531 = vld [vmem:[#allocation4 + $0x2d0] sm:$0xff]
    %v1532 = vld [vmem:[#allocation4 + $0x2d8] sm:$0xff]
    %v1533 = vld [vmem:[#allocation4 + $0x2e0] sm:$0xff]
    %v1534 = vld [vmem:[#allocation4 + $0x2e8] sm:$0xff]
    %v1535 = vld [vmem:[#allocation4 + $0x2f0] sm:$0xff]
    %v1536 = vld [vmem:[#allocation4 + $0x2f8] sm:$0xff]
    %v1537 = vld [vmem:[#allocation4 + $0x300] sm:$0xff]
    %v1538 = vld [vmem:[#allocation4 + $0x308] sm:$0xff]
    %v1539 = vld [vmem:[#allocation4 + $0x310] sm:$0xff]
    %v1540 = vld [vmem:[#allocation4 + $0x318] sm:$0xff]
    %v1541 = vld [vmem:[#allocation4 + $0x320] sm:$0xff]
    %v1542 = vld [vmem:[#allocation4 + $0x328] sm:$0xff]
    %v1543 = vld [vmem:[#allocation4 + $0x330] sm:$0xff]
    %v1544 = vld [vmem:[#allocation4 + $0x338] sm:$0xff]
    %v1545 = vld [vmem:[#allocation4 + $0x340] sm:$0xff]
    %v1546 = vld [vmem:[#allocation4 + $0x348] sm:$0xff]
    %v1547 = vld [vmem:[#allocation4 + $0x350] sm:$0xff]
    %v1548 = vld [vmem:[#allocation4 + $0x358] sm:$0xff]
    %v1549 = vld [vmem:[#allocation4 + $0x360] sm:$0xff]
    %v1550 = vld [vmem:[#allocation4 + $0x368] sm:$0xff]
    %v1551 = vld [vmem:[#allocation4 + $0x370] sm:$0xff]
    %v1552 = vld [vmem:[#allocation4 + $0x378] sm:$0xff]
    %v1553 = vld [vmem:[#allocation4 + $0x380] sm:$0xff]
    %v1554 = vld [vmem:[#allocation4 + $0x388] sm:$0xff]
    %v1555 = vld [vmem:[#allocation4 + $0x390] sm:$0xff]
    %v1556 = vld [vmem:[#allocation4 + $0x398] sm:$0xff]
    %v1557 = vld [vmem:[#allocation4 + $0x3a0] sm:$0xff]
    %v1558 = vld [vmem:[#allocation4 + $0x3a8] sm:$0xff]
    %v1559 = vld [vmem:[#allocation4 + $0x3b0] sm:$0xff]
    %v1560 = vld [vmem:[#allocation4 + $0x3b8] sm:$0xff]
    %v1561 = vld [vmem:[#allocation4 + $0x3c0] sm:$0xff]
    %v1562 = vld [vmem:[#allocation4 + $0x3c8] sm:$0xff]
    %v1563 = vld [vmem:[#allocation4 + $0x3d0] sm:$0xff]
    %v1564 = vld [vmem:[#allocation4 + $0x3d8] sm:$0xff]
    %v1565 = vld [vmem:[#allocation4 + $0x3e0] sm:$0xff]
    %v1566 = vld [vmem:[#allocation4 + $0x3e8] sm:$0xff]
    %v1567 = vld [vmem:[#allocation4 + $0x3f0] sm:$0xff]
    %v1568 = vld [vmem:[#allocation4 + $0x3f8] sm:$0xff]
    %v1569 = vld [vmem:[%s5] sm:$0xf]
    %v1571 = vperm.slane %v1569, 0
    %v1572 = vperm.slane %v1569, 1
    %v1573 = vperm.slane %v1569, 2
    %v1574 = vperm.slane %v1569, 3
    %v1707 = vunpack.c.l.b16 %v1441
    %v1708 = vunpack.c.h.b16 %v1441
    %v1709 = vunpack.c.l.b16 %v1442
    %v1710 = vunpack.c.h.b16 %v1442
    %v1711 = vunpack.c.l.b16 %v1443
    %v1712 = vunpack.c.h.b16 %v1443
    %v1713 = vunpack.c.l.b16 %v1444
    %v1714 = vunpack.c.h.b16 %v1444
    %v1715 = vunpack.c.l.b16 %v1445
    %v1716 = vunpack.c.h.b16 %v1445
    %v1717 = vunpack.c.l.b16 %v1446
    %v1718 = vunpack.c.h.b16 %v1446
    %v1719 = vunpack.c.l.b16 %v1447
    %v1720 = vunpack.c.h.b16 %v1447
    %v1721 = vunpack.c.l.b16 %v1448
    %v1722 = vunpack.c.h.b16 %v1448
    %v1723 = vunpack.c.l.b16 %v1449
    %v1724 = vunpack.c.h.b16 %v1449
    %v1725 = vunpack.c.l.b16 %v1450
    %v1726 = vunpack.c.h.b16 %v1450
    %v1727 = vunpack.c.l.b16 %v1451
    %v1728 = vunpack.c.h.b16 %v1451
    %v1729 = vunpack.c.l.b16 %v1452
    %v1730 = vunpack.c.h.b16 %v1452
    %v1731 = vunpack.c.l.b16 %v1453
    %v1732 = vunpack.c.h.b16 %v1453
    %v1733 = vunpack.c.l.b16 %v1454
    %v1734 = vunpack.c.h.b16 %v1454
    %v1735 = vunpack.c.l.b16 %v1455
    %v1736 = vunpack.c.h.b16 %v1455
    %v1737 = vunpack.c.l.b16 %v1456
    %v1738 = vunpack.c.h.b16 %v1456
    %v1739 = vunpack.c.l.b16 %v1457
    %v1740 = vunpack.c.h.b16 %v1457
    %v1741 = vunpack.c.l.b16 %v1458
    %v1742 = vunpack.c.h.b16 %v1458
    %v1743 = vunpack.c.l.b16 %v1459
    %v1744 = vunpack.c.h.b16 %v1459
    %v1745 = vunpack.c.l.b16 %v1460
    %v1746 = vunpack.c.h.b16 %v1460
    %v1747 = vunpack.c.l.b16 %v1461
    %v1748 = vunpack.c.h.b16 %v1461
    %v1749 = vunpack.c.l.b16 %v1462
    %v1750 = vunpack.c.h.b16 %v1462
    %v1751 = vunpack.c.l.b16 %v1463
    %v1752 = vunpack.c.h.b16 %v1463
    %v1753 = vunpack.c.l.b16 %v1464
    %v1754 = vunpack.c.h.b16 %v1464
    %v1755 = vunpack.c.l.b16 %v1465
    %v1756 = vunpack.c.h.b16 %v1465
    %v1757 = vunpack.c.l.b16 %v1466
    %v1758 = vunpack.c.h.b16 %v1466
    %v1759 = vunpack.c.l.b16 %v1467
    %v1760 = vunpack.c.h.b16 %v1467
    %v1761 = vunpack.c.l.b16 %v1468
    %v1762 = vunpack.c.h.b16 %v1468
    %v1763 = vunpack.c.l.b16 %v1469
    %v1764 = vunpack.c.h.b16 %v1469
    %v1765 = vunpack.c.l.b16 %v1470
    %v1766 = vunpack.c.h.b16 %v1470
    %v1767 = vunpack.c.l.b16 %v1471
    %v1768 = vunpack.c.h.b16 %v1471
    %v1769 = vunpack.c.l.b16 %v1472
    %v1770 = vunpack.c.h.b16 %v1472
    %v1771 = vunpack.c.l.b16 %v1473
    %v1772 = vunpack.c.h.b16 %v1473
    %v1773 = vunpack.c.l.b16 %v1474
    %v1774 = vunpack.c.h.b16 %v1474
    %v1775 = vunpack.c.l.b16 %v1475
    %v1776 = vunpack.c.h.b16 %v1475
    %v1777 = vunpack.c.l.b16 %v1476
    %v1778 = vunpack.c.h.b16 %v1476
    %v1779 = vunpack.c.l.b16 %v1477
    %v1780 = vunpack.c.h.b16 %v1477
    %v1781 = vunpack.c.l.b16 %v1478
    %v1782 = vunpack.c.h.b16 %v1478
    %v1783 = vunpack.c.l.b16 %v1479
    %v1784 = vunpack.c.h.b16 %v1479
    %v1785 = vunpack.c.l.b16 %v1480
    %v1786 = vunpack.c.h.b16 %v1480
    %v1787 = vunpack.c.l.b16 %v1481
    %v1788 = vunpack.c.h.b16 %v1481
    %v1789 = vunpack.c.l.b16 %v1482
    %v1790 = vunpack.c.h.b16 %v1482
    %v1791 = vunpack.c.l.b16 %v1483
    %v1792 = vunpack.c.h.b16 %v1483
    %v1793 = vunpack.c.l.b16 %v1484
    %v1794 = vunpack.c.h.b16 %v1484
    %v1795 = vunpack.c.l.b16 %v1485
    %v1796 = vunpack.c.h.b16 %v1485
    %v1797 = vunpack.c.l.b16 %v1486
    %v1798 = vunpack.c.h.b16 %v1486
    %v1799 = vunpack.c.l.b16 %v1487
    %v1800 = vunpack.c.h.b16 %v1487
    %v1801 = vunpack.c.l.b16 %v1488
    %v1802 = vunpack.c.h.b16 %v1488
    %v1803 = vunpack.c.l.b16 %v1489
    %v1804 = vunpack.c.h.b16 %v1489
    %v1805 = vunpack.c.l.b16 %v1490
    %v1806 = vunpack.c.h.b16 %v1490
    %v1807 = vunpack.c.l.b16 %v1491
    %v1808 = vunpack.c.h.b16 %v1491
    %v1809 = vunpack.c.l.b16 %v1492
    %v1810 = vunpack.c.h.b16 %v1492
    %v1811 = vunpack.c.l.b16 %v1493
    %v1812 = vunpack.c.h.b16 %v1493
    %v1813 = vunpack.c.l.b16 %v1494
    %v1814 = vunpack.c.h.b16 %v1494
    %v1815 = vunpack.c.l.b16 %v1495
    %v1816 = vunpack.c.h.b16 %v1495
    %v1817 = vunpack.c.l.b16 %v1496
    %v1818 = vunpack.c.h.b16 %v1496
    %v1819 = vunpack.c.l.b16 %v1497
    %v1820 = vunpack.c.h.b16 %v1497
    %v1821 = vunpack.c.l.b16 %v1498
    %v1822 = vunpack.c.h.b16 %v1498
    %v1823 = vunpack.c.l.b16 %v1499
    %v1824 = vunpack.c.h.b16 %v1499
    %v1825 = vunpack.c.l.b16 %v1500
    %v1826 = vunpack.c.h.b16 %v1500
    %v1827 = vunpack.c.l.b16 %v1501
    %v1828 = vunpack.c.h.b16 %v1501
    %v1829 = vunpack.c.l.b16 %v1502
    %v1830 = vunpack.c.h.b16 %v1502
    %v1831 = vunpack.c.l.b16 %v1503
    %v1832 = vunpack.c.h.b16 %v1503
    %v1833 = vunpack.c.l.b16 %v1504
    %v1834 = vunpack.c.h.b16 %v1504
    %v1835 = vunpack.c.l.b16 %v1505
    %v1836 = vunpack.c.h.b16 %v1505
    %v1837 = vunpack.c.l.b16 %v1506
    %v1838 = vunpack.c.h.b16 %v1506
    %v1839 = vunpack.c.l.b16 %v1507
    %v1840 = vunpack.c.h.b16 %v1507
    %v1841 = vunpack.c.l.b16 %v1508
    %v1842 = vunpack.c.h.b16 %v1508
    %v1843 = vunpack.c.l.b16 %v1509
    %v1844 = vunpack.c.h.b16 %v1509
    %v1845 = vunpack.c.l.b16 %v1510
    %v1846 = vunpack.c.h.b16 %v1510
    %v1847 = vunpack.c.l.b16 %v1511
    %v1848 = vunpack.c.h.b16 %v1511
    %v1849 = vunpack.c.l.b16 %v1512
    %v1850 = vunpack.c.h.b16 %v1512
    %v1851 = vunpack.c.l.b16 %v1513
    %v1852 = vunpack.c.h.b16 %v1513
    %v1853 = vunpack.c.l.b16 %v1514
    %v1854 = vunpack.c.h.b16 %v1514
    %v1855 = vunpack.c.l.b16 %v1515
    %v1856 = vunpack.c.h.b16 %v1515
    %v1857 = vunpack.c.l.b16 %v1516
    %v1858 = vunpack.c.h.b16 %v1516
    %v1859 = vunpack.c.l.b16 %v1517
    %v1860 = vunpack.c.h.b16 %v1517
    %v1861 = vunpack.c.l.b16 %v1518
    %v1862 = vunpack.c.h.b16 %v1518
    %v1863 = vunpack.c.l.b16 %v1519
    %v1864 = vunpack.c.h.b16 %v1519
    %v1865 = vunpack.c.l.b16 %v1520
    %v1866 = vunpack.c.h.b16 %v1520
    %v1867 = vunpack.c.l.b16 %v1521
    %v1868 = vunpack.c.h.b16 %v1521
    %v1869 = vunpack.c.l.b16 %v1522
    %v1870 = vunpack.c.h.b16 %v1522
    %v1871 = vunpack.c.l.b16 %v1523
    %v1872 = vunpack.c.h.b16 %v1523
    %v1873 = vunpack.c.l.b16 %v1524
    %v1874 = vunpack.c.h.b16 %v1524
    %v1875 = vunpack.c.l.b16 %v1525
    %v1876 = vunpack.c.h.b16 %v1525
    %v1877 = vunpack.c.l.b16 %v1526
    %v1878 = vunpack.c.h.b16 %v1526
    %v1879 = vunpack.c.l.b16 %v1527
    %v1880 = vunpack.c.h.b16 %v1527
    %v1881 = vunpack.c.l.b16 %v1528
    %v1882 = vunpack.c.h.b16 %v1528
    %v1883 = vunpack.c.l.b16 %v1529
    %v1884 = vunpack.c.h.b16 %v1529
    %v1885 = vunpack.c.l.b16 %v1530
    %v1886 = vunpack.c.h.b16 %v1530
    %v1887 = vunpack.c.l.b16 %v1531
    %v1888 = vunpack.c.h.b16 %v1531
    %v1889 = vunpack.c.l.b16 %v1532
    %v1890 = vunpack.c.h.b16 %v1532
    %v1891 = vunpack.c.l.b16 %v1533
    %v1892 = vunpack.c.h.b16 %v1533
    %v1893 = vunpack.c.l.b16 %v1534
    %v1894 = vunpack.c.h.b16 %v1534
    %v1895 = vunpack.c.l.b16 %v1535
    %v1896 = vunpack.c.h.b16 %v1535
    %v1897 = vunpack.c.l.b16 %v1536
    %v1898 = vunpack.c.h.b16 %v1536
    %v1899 = vunpack.c.l.b16 %v1537
    %v1900 = vunpack.c.h.b16 %v1537
    %v1901 = vunpack.c.l.b16 %v1538
    %v1902 = vunpack.c.h.b16 %v1538
    %v1903 = vunpack.c.l.b16 %v1539
    %v1904 = vunpack.c.h.b16 %v1539
    %v1905 = vunpack.c.l.b16 %v1540
    %v1906 = vunpack.c.h.b16 %v1540
    %v1907 = vunpack.c.l.b16 %v1541
    %v1908 = vunpack.c.h.b16 %v1541
    %v1909 = vunpack.c.l.b16 %v1542
    %v1910 = vunpack.c.h.b16 %v1542
    %v1911 = vunpack.c.l.b16 %v1543
    %v1912 = vunpack.c.h.b16 %v1543
    %v1913 = vunpack.c.l.b16 %v1544
    %v1914 = vunpack.c.h.b16 %v1544
    %v1915 = vunpack.c.l.b16 %v1545
    %v1916 = vunpack.c.h.b16 %v1545
    %v1917 = vunpack.c.l.b16 %v1546
    %v1918 = vunpack.c.h.b16 %v1546
    %v1919 = vunpack.c.l.b16 %v1547
    %v1920 = vunpack.c.h.b16 %v1547
    %v1921 = vunpack.c.l.b16 %v1548
    %v1922 = vunpack.c.h.b16 %v1548
    %v1923 = vunpack.c.l.b16 %v1549
    %v1924 = vunpack.c.h.b16 %v1549
    %v1925 = vunpack.c.l.b16 %v1550
    %v1926 = vunpack.c.h.b16 %v1550
    %v1927 = vunpack.c.l.b16 %v1551
    %v1928 = vunpack.c.h.b16 %v1551
    %v1929 = vunpack.c.l.b16 %v1552
    %v1930 = vunpack.c.h.b16 %v1552
    %v1931 = vunpack.c.l.b16 %v1553
    %v1932 = vunpack.c.h.b16 %v1553
    %v1933 = vunpack.c.l.b16 %v1554
    %v1934 = vunpack.c.h.b16 %v1554
    %v1935 = vunpack.c.l.b16 %v1555
    %v1936 = vunpack.c.h.b16 %v1555
    %v1937 = vunpack.c.l.b16 %v1556
    %v1938 = vunpack.c.h.b16 %v1556
    %v1939 = vunpack.c.l.b16 %v1557
    %v1940 = vunpack.c.h.b16 %v1557
    %v1941 = vunpack.c.l.b16 %v1558
    %v1942 = vunpack.c.h.b16 %v1558
    %v1943 = vunpack.c.l.b16 %v1559
    %v1944 = vunpack.c.h.b16 %v1559
    %v1945 = vunpack.c.l.b16 %v1560
    %v1946 = vunpack.c.h.b16 %v1560
    %v1947 = vunpack.c.l.b16 %v1561
    %v1948 = vunpack.c.h.b16 %v1561
    %v1949 = vunpack.c.l.b16 %v1562
    %v1950 = vunpack.c.h.b16 %v1562
    %v1951 = vunpack.c.l.b16 %v1563
    %v1952 = vunpack.c.h.b16 %v1563
    %v1953 = vunpack.c.l.b16 %v1564
    %v1954 = vunpack.c.h.b16 %v1564
    %v1955 = vunpack.c.l.b16 %v1565
    %v1956 = vunpack.c.h.b16 %v1565
    %v1957 = vunpack.c.l.b16 %v1566
    %v1958 = vunpack.c.h.b16 %v1566
    %v1959 = vunpack.c.l.b16 %v1567
    %v1960 = vunpack.c.h.b16 %v1567
    %v1961 = vunpack.c.l.b16 %v1568
    %v1962 = vunpack.c.h.b16 %v1568
    %v1963 = vpack.c.b16 %v1711, %v1707
    %v1964 = vpack.c.b16 %v1712, %v1708
    %v1965 = vpack.c.b16 %v1713, %v1709
    %v1966 = vpack.c.b16 %v1714, %v1710
    %v1967 = vpack.c.b16 %v1719, %v1715
    %v1968 = vpack.c.b16 %v1720, %v1716
    %v1969 = vpack.c.b16 %v1721, %v1717
    %v1970 = vpack.c.b16 %v1722, %v1718
    %v1971 = vpack.c.b16 %v1727, %v1723
    %v1972 = vpack.c.b16 %v1728, %v1724
    %v1973 = vpack.c.b16 %v1729, %v1725
    %v1974 = vpack.c.b16 %v1730, %v1726
    %v1975 = vpack.c.b16 %v1735, %v1731
    %v1976 = vpack.c.b16 %v1736, %v1732
    %v1977 = vpack.c.b16 %v1737, %v1733
    %v1978 = vpack.c.b16 %v1738, %v1734
    %v1979 = vpack.c.b16 %v1743, %v1739
    %v1980 = vpack.c.b16 %v1744, %v1740
    %v1981 = vpack.c.b16 %v1745, %v1741
    %v1982 = vpack.c.b16 %v1746, %v1742
    %v1983 = vpack.c.b16 %v1751, %v1747
    %v1984 = vpack.c.b16 %v1752, %v1748
    %v1985 = vpack.c.b16 %v1753, %v1749
    %v1986 = vpack.c.b16 %v1754, %v1750
    %v1987 = vpack.c.b16 %v1759, %v1755
    %v1988 = vpack.c.b16 %v1760, %v1756
    %v1989 = vpack.c.b16 %v1761, %v1757
    %v1990 = vpack.c.b16 %v1762, %v1758
    %v1991 = vpack.c.b16 %v1767, %v1763
    %v1992 = vpack.c.b16 %v1768, %v1764
    %v1993 = vpack.c.b16 %v1769, %v1765
    %v1994 = vpack.c.b16 %v1770, %v1766
    %v1995 = vpack.c.b16 %v1775, %v1771
    %v1996 = vpack.c.b16 %v1776, %v1772
    %v1997 = vpack.c.b16 %v1777, %v1773
    %v1998 = vpack.c.b16 %v1778, %v1774
    %v1999 = vpack.c.b16 %v1783, %v1779
    %v2000 = vpack.c.b16 %v1784, %v1780
    %v2001 = vpack.c.b16 %v1785, %v1781
    %v2002 = vpack.c.b16 %v1786, %v1782
    %v2003 = vpack.c.b16 %v1791, %v1787
    %v2004 = vpack.c.b16 %v1792, %v1788
    %v2005 = vpack.c.b16 %v1793, %v1789
    %v2006 = vpack.c.b16 %v1794, %v1790
    %v2007 = vpack.c.b16 %v1799, %v1795
    %v2008 = vpack.c.b16 %v1800, %v1796
    %v2009 = vpack.c.b16 %v1801, %v1797
    %v2010 = vpack.c.b16 %v1802, %v1798
    %v2011 = vpack.c.b16 %v1807, %v1803
    %v2012 = vpack.c.b16 %v1808, %v1804
    %v2013 = vpack.c.b16 %v1809, %v1805
    %v2014 = vpack.c.b16 %v1810, %v1806
    %v2015 = vpack.c.b16 %v1815, %v1811
    %v2016 = vpack.c.b16 %v1816, %v1812
    %v2017 = vpack.c.b16 %v1817, %v1813
    %v2018 = vpack.c.b16 %v1818, %v1814
    %v2019 = vpack.c.b16 %v1823, %v1819
    %v2020 = vpack.c.b16 %v1824, %v1820
    %v2021 = vpack.c.b16 %v1825, %v1821
    %v2022 = vpack.c.b16 %v1826, %v1822
    %v2023 = vpack.c.b16 %v1831, %v1827
    %v2024 = vpack.c.b16 %v1832, %v1828
    %v2025 = vpack.c.b16 %v1833, %v1829
    %v2026 = vpack.c.b16 %v1834, %v1830
    %v2027 = vpack.c.b16 %v1839, %v1835
    %v2028 = vpack.c.b16 %v1840, %v1836
    %v2029 = vpack.c.b16 %v1841, %v1837
    %v2030 = vpack.c.b16 %v1842, %v1838
    %v2031 = vpack.c.b16 %v1847, %v1843
    %v2032 = vpack.c.b16 %v1848, %v1844
    %v2033 = vpack.c.b16 %v1849, %v1845
    %v2034 = vpack.c.b16 %v1850, %v1846
    %v2035 = vpack.c.b16 %v1855, %v1851
    %v2036 = vpack.c.b16 %v1856, %v1852
    %v2037 = vpack.c.b16 %v1857, %v1853
    %v2038 = vpack.c.b16 %v1858, %v1854
    %v2039 = vpack.c.b16 %v1863, %v1859
    %v2040 = vpack.c.b16 %v1864, %v1860
    %v2041 = vpack.c.b16 %v1865, %v1861
    %v2042 = vpack.c.b16 %v1866, %v1862
    %v2043 = vpack.c.b16 %v1871, %v1867
    %v2044 = vpack.c.b16 %v1872, %v1868
    %v2045 = vpack.c.b16 %v1873, %v1869
    %v2046 = vpack.c.b16 %v1874, %v1870
    %v2047 = vpack.c.b16 %v1879, %v1875
    %v2048 = vpack.c.b16 %v1880, %v1876
    %v2049 = vpack.c.b16 %v1881, %v1877
    %v2050 = vpack.c.b16 %v1882, %v1878
    %v2051 = vpack.c.b16 %v1887, %v1883
    %v2052 = vpack.c.b16 %v1888, %v1884
    %v2053 = vpack.c.b16 %v1889, %v1885
    %v2054 = vpack.c.b16 %v1890, %v1886
    %v2055 = vpack.c.b16 %v1895, %v1891
    %v2056 = vpack.c.b16 %v1896, %v1892
    %v2057 = vpack.c.b16 %v1897, %v1893
    %v2058 = vpack.c.b16 %v1898, %v1894
    %v2059 = vpack.c.b16 %v1903, %v1899
    %v2060 = vpack.c.b16 %v1904, %v1900
    %v2061 = vpack.c.b16 %v1905, %v1901
    %v2062 = vpack.c.b16 %v1906, %v1902
    %v2063 = vpack.c.b16 %v1911, %v1907
    %v2064 = vpack.c.b16 %v1912, %v1908
    %v2065 = vpack.c.b16 %v1913, %v1909
    %v2066 = vpack.c.b16 %v1914, %v1910
    %v2067 = vpack.c.b16 %v1919, %v1915
    %v2068 = vpack.c.b16 %v1920, %v1916
    %v2069 = vpack.c.b16 %v1921, %v1917
    %v2070 = vpack.c.b16 %v1922, %v1918
    %v2071 = vpack.c.b16 %v1927, %v1923
    %v2072 = vpack.c.b16 %v1928, %v1924
    %v2073 = vpack.c.b16 %v1929, %v1925
    %v2074 = vpack.c.b16 %v1930, %v1926
    %v2075 = vpack.c.b16 %v1935, %v1931
    %v2076 = vpack.c.b16 %v1936, %v1932
    %v2077 = vpack.c.b16 %v1937, %v1933
    %v2078 = vpack.c.b16 %v1938, %v1934
    %v2079 = vpack.c.b16 %v1943, %v1939
    %v2080 = vpack.c.b16 %v1944, %v1940
    %v2081 = vpack.c.b16 %v1945, %v1941
    %v2082 = vpack.c.b16 %v1946, %v1942
    %v2083 = vpack.c.b16 %v1951, %v1947
    %v2084 = vpack.c.b16 %v1952, %v1948
    %v2085 = vpack.c.b16 %v1953, %v1949
    %v2086 = vpack.c.b16 %v1954, %v1950
    %v2087 = vpack.c.b16 %v1959, %v1955
    %v2088 = vpack.c.b16 %v1960, %v1956
    %v2089 = vpack.c.b16 %v1961, %v1957
    %v2090 = vpack.c.b16 %v1962, %v1958
    %2219 = vmatpush.bf16.msra.mxu0 %v1991
    %2220 = vmatpush.bf16.msra.mxu0 %v1987
    %2221 = vmatpush.bf16.msra.mxu0 %v1983
    %2222 = vmatpush.bf16.msra.mxu0 %v1979
    %2223 = vmatpush.bf16.msra.mxu0 %v1975
    %2224 = vmatpush.bf16.msra.mxu0 %v1971
    %2225 = vmatpush.bf16.msra.mxu0 %v1967
    %2226 = vmatpush.bf16.msra.mxu0 %v1963
    %2227 = vmatmul.bf16.gmra.mxu0 %v1437
    %v2228 = vpop.f32.mrf.mxu0
    %v2229 = vadd.f32 %v1571, %v2228
    %v2230 = vpop.f32.mrf.mxu0
    %2231 = vdwg.mxu0
    %2232 = vmatpush.bf16.msra.mxu0 %v2023
    %2233 = vmatpush.bf16.msra.mxu0 %v2019
    %2234 = vmatpush.bf16.msra.mxu0 %v2015
    %2235 = vmatpush.bf16.msra.mxu0 %v2011
    %2236 = vmatpush.bf16.msra.mxu0 %v2007
    %2237 = vmatpush.bf16.msra.mxu0 %v2003
    %2238 = vmatpush.bf16.msra.mxu0 %v1999
    %2239 = vmatpush.bf16.msra.mxu0 %v1995
    %2240 = vmatmul.bf16.gmra.mxu0 %v1438
    %v2241 = vpop.f32.mrf.mxu0
    %v2242 = vadd.f32 %v2229, %v2241
    %v2243 = vpop.f32.mrf.mxu0
    %2244 = vdwg.mxu0
    %2245 = vmatpush.bf16.msra.mxu0 %v2055
    %2246 = vmatpush.bf16.msra.mxu0 %v2051
    %2247 = vmatpush.bf16.msra.mxu0 %v2047
    %2248 = vmatpush.bf16.msra.mxu0 %v2043
    %2249 = vmatpush.bf16.msra.mxu0 %v2039
    %2250 = vmatpush.bf16.msra.mxu0 %v2035
    %2251 = vmatpush.bf16.msra.mxu0 %v2031
    %2252 = vmatpush.bf16.msra.mxu0 %v2027
    %2253 = vmatmul.bf16.gmra.mxu0 %v1439
    %v2254 = vpop.f32.mrf.mxu0
    %v2255 = vadd.f32 %v2242, %v2254
    %v2256 = vpop.f32.mrf.mxu0
    %2257 = vdwg.mxu0
    %2258 = vmatpush.bf16.msra.mxu0 %v2087
    %2259 = vmatpush.bf16.msra.mxu0 %v2083
    %2260 = vmatpush.bf16.msra.mxu0 %v2079
    %2261 = vmatpush.bf16.msra.mxu0 %v2075
    %2262 = vmatpush.bf16.msra.mxu0 %v2071
    %2263 = vmatpush.bf16.msra.mxu0 %v2067
    %2264 = vmatpush.bf16.msra.mxu0 %v2063
    %2265 = vmatpush.bf16.msra.mxu0 %v2059
    %2266 = vmatmul.bf16.gmra.mxu0 %v1440
    %v2267 = vpop.f32.mrf.mxu0
    %v2268 = vadd.f32 %v2255, %v2267
    %v2269 = vpop.f32.mrf.mxu0
    %2270 = vdwg.mxu0
    %2271 = vmatpush.bf16.msra.mxu0 %v1992
    %2272 = vmatpush.bf16.msra.mxu0 %v1988
    %2273 = vmatpush.bf16.msra.mxu0 %v1984
    %2274 = vmatpush.bf16.msra.mxu0 %v1980
    %2275 = vmatpush.bf16.msra.mxu0 %v1976
    %2276 = vmatpush.bf16.msra.mxu0 %v1972
    %2277 = vmatpush.bf16.msra.mxu0 %v1968
    %2278 = vmatpush.bf16.msra.mxu0 %v1964
    %2279 = vmatmul.bf16.gmra.mxu0 %v1437
    %v2280 = vpop.f32.mrf.mxu0
    %v2281 = vadd.f32 %v1572, %v2280
    %v2282 = vpop.f32.mrf.mxu0
    %2283 = vdwg.mxu0
    %2284 = vmatpush.bf16.msra.mxu0 %v2024
    %2285 = vmatpush.bf16.msra.mxu0 %v2020
    %2286 = vmatpush.bf16.msra.mxu0 %v2016
    %2287 = vmatpush.bf16.msra.mxu0 %v2012
    %2288 = vmatpush.bf16.msra.mxu0 %v2008
    %2289 = vmatpush.bf16.msra.mxu0 %v2004
    %2290 = vmatpush.bf16.msra.mxu0 %v2000
    %2291 = vmatpush.bf16.msra.mxu0 %v1996
    %2292 = vmatmul.bf16.gmra.mxu0 %v1438
    %v2293 = vpop.f32.mrf.mxu0
    %v2294 = vadd.f32 %v2281, %v2293
    %v2295 = vpop.f32.mrf.mxu0
    %2296 = vdwg.mxu0
    %2297 = vmatpush.bf16.msra.mxu0 %v2056
    %2298 = vmatpush.bf16.msra.mxu0 %v2052
    %2299 = vmatpush.bf16.msra.mxu0 %v2048
    %2300 = vmatpush.bf16.msra.mxu0 %v2044
    %2301 = vmatpush.bf16.msra.mxu0 %v2040
    %2302 = vmatpush.bf16.msra.mxu0 %v2036
    %2303 = vmatpush.bf16.msra.mxu0 %v2032
    %2304 = vmatpush.bf16.msra.mxu0 %v2028
    %2305 = vmatmul.bf16.gmra.mxu0 %v1439
    %v2306 = vpop.f32.mrf.mxu0
    %v2307 = vadd.f32 %v2294, %v2306
    %v2308 = vpop.f32.mrf.mxu0
    %2309 = vdwg.mxu0
    %2310 = vmatpush.bf16.msra.mxu0 %v2088
    %2311 = vmatpush.bf16.msra.mxu0 %v2084
    %2312 = vmatpush.bf16.msra.mxu0 %v2080
    %2313 = vmatpush.bf16.msra.mxu0 %v2076
    %2314 = vmatpush.bf16.msra.mxu0 %v2072
    %2315 = vmatpush.bf16.msra.mxu0 %v2068
    %2316 = vmatpush.bf16.msra.mxu0 %v2064
    %2317 = vmatpush.bf16.msra.mxu0 %v2060
    %2318 = vmatmul.bf16.gmra.mxu0 %v1440
    %v2319 = vpop.f32.mrf.mxu0
    %v2320 = vadd.f32 %v2307, %v2319
    %v2321 = vpop.f32.mrf.mxu0
    %2322 = vdwg.mxu0
    %2323 = vmatpush.bf16.msra.mxu0 %v1993
    %2324 = vmatpush.bf16.msra.mxu0 %v1989
    %2325 = vmatpush.bf16.msra.mxu0 %v1985
    %2326 = vmatpush.bf16.msra.mxu0 %v1981
    %2327 = vmatpush.bf16.msra.mxu0 %v1977
    %2328 = vmatpush.bf16.msra.mxu0 %v1973
    %2329 = vmatpush.bf16.msra.mxu0 %v1969
    %2330 = vmatpush.bf16.msra.mxu0 %v1965
    %2331 = vmatmul.bf16.gmra.mxu0 %v1437
    %v2332 = vpop.f32.mrf.mxu0
    %v2333 = vadd.f32 %v1573, %v2332
    %v2334 = vpop.f32.mrf.mxu0
    %2335 = vdwg.mxu0
    %2336 = vmatpush.bf16.msra.mxu0 %v2025
    %2337 = vmatpush.bf16.msra.mxu0 %v2021
    %2338 = vmatpush.bf16.msra.mxu0 %v2017
    %2339 = vmatpush.bf16.msra.mxu0 %v2013
    %2340 = vmatpush.bf16.msra.mxu0 %v2009
    %2341 = vmatpush.bf16.msra.mxu0 %v2005
    %2342 = vmatpush.bf16.msra.mxu0 %v2001
    %2343 = vmatpush.bf16.msra.mxu0 %v1997
    %2344 = vmatmul.bf16.gmra.mxu0 %v1438
    %v2345 = vpop.f32.mrf.mxu0
    %v2346 = vadd.f32 %v2333, %v2345
    %v2347 = vpop.f32.mrf.mxu0
    %2348 = vdwg.mxu0
    %2349 = vmatpush.bf16.msra.mxu0 %v2057
    %2350 = vmatpush.bf16.msra.mxu0 %v2053
    %2351 = vmatpush.bf16.msra.mxu0 %v2049
    %2352 = vmatpush.bf16.msra.mxu0 %v2045
    %2353 = vmatpush.bf16.msra.mxu0 %v2041
    %2354 = vmatpush.bf16.msra.mxu0 %v2037
    %2355 = vmatpush.bf16.msra.mxu0 %v2033
    %2356 = vmatpush.bf16.msra.mxu0 %v2029
    %2357 = vmatmul.bf16.gmra.mxu0 %v1439
    %v2358 = vpop.f32.mrf.mxu0
    %v2359 = vadd.f32 %v2346, %v2358
    %v2360 = vpop.f32.mrf.mxu0
    %2361 = vdwg.mxu0
    %2362 = vmatpush.bf16.msra.mxu0 %v2089
    %2363 = vmatpush.bf16.msra.mxu0 %v2085
    %2364 = vmatpush.bf16.msra.mxu0 %v2081
    %2365 = vmatpush.bf16.msra.mxu0 %v2077
    %2366 = vmatpush.bf16.msra.mxu0 %v2073
    %2367 = vmatpush.bf16.msra.mxu0 %v2069
    %2368 = vmatpush.bf16.msra.mxu0 %v2065
    %2369 = vmatpush.bf16.msra.mxu0 %v2061
    %2370 = vmatmul.bf16.gmra.mxu0 %v1440
    %v2371 = vpop.f32.mrf.mxu0
    %v2372 = vadd.f32 %v2359, %v2371
    %v2373 = vpop.f32.mrf.mxu0
    %2374 = vdwg.mxu0
    %2375 = vmatpush.bf16.msra.mxu0 %v1994
    %2376 = vmatpush.bf16.msra.mxu0 %v1990
    %2377 = vmatpush.bf16.msra.mxu0 %v1986
    %2378 = vmatpush.bf16.msra.mxu0 %v1982
    %2379 = vmatpush.bf16.msra.mxu0 %v1978
    %2380 = vmatpush.bf16.msra.mxu0 %v1974
    %2381 = vmatpush.bf16.msra.mxu0 %v1970
    %2382 = vmatpush.bf16.msra.mxu0 %v1966
    %2383 = vmatmul.bf16.gmra.mxu0 %v1437
    %v2384 = vpop.f32.mrf.mxu0
    %v2385 = vadd.f32 %v1574, %v2384
    %v2386 = vpop.f32.mrf.mxu0
    %2387 = vdwg.mxu0
    %2388 = vmatpush.bf16.msra.mxu0 %v2026
    %2389 = vmatpush.bf16.msra.mxu0 %v2022
    %2390 = vmatpush.bf16.msra.mxu0 %v2018
    %2391 = vmatpush.bf16.msra.mxu0 %v2014
    %2392 = vmatpush.bf16.msra.mxu0 %v2010
    %2393 = vmatpush.bf16.msra.mxu0 %v2006
    %2394 = vmatpush.bf16.msra.mxu0 %v2002
    %2395 = vmatpush.bf16.msra.mxu0 %v1998
    %2396 = vmatmul.bf16.gmra.mxu0 %v1438
    %v2397 = vpop.f32.mrf.mxu0
    %v2398 = vadd.f32 %v2385, %v2397
    %v2399 = vpop.f32.mrf.mxu0
    %2400 = vdwg.mxu0
    %2401 = vmatpush.bf16.msra.mxu0 %v2058
    %2402 = vmatpush.bf16.msra.mxu0 %v2054
    %2403 = vmatpush.bf16.msra.mxu0 %v2050
    %2404 = vmatpush.bf16.msra.mxu0 %v2046
    %2405 = vmatpush.bf16.msra.mxu0 %v2042
    %2406 = vmatpush.bf16.msra.mxu0 %v2038
    %2407 = vmatpush.bf16.msra.mxu0 %v2034
    %2408 = vmatpush.bf16.msra.mxu0 %v2030
    %2409 = vmatmul.bf16.gmra.mxu0 %v1439
    %v2410 = vpop.f32.mrf.mxu0
    %v2411 = vadd.f32 %v2398, %v2410
    %v2412 = vpop.f32.mrf.mxu0
    %2413 = vdwg.mxu0
    %2414 = vmatpush.bf16.msra.mxu0 %v2090
    %2415 = vmatpush.bf16.msra.mxu0 %v2086
    %2416 = vmatpush.bf16.msra.mxu0 %v2082
    %2417 = vmatpush.bf16.msra.mxu0 %v2078
    %2418 = vmatpush.bf16.msra.mxu0 %v2074
    %2419 = vmatpush.bf16.msra.mxu0 %v2070
    %2420 = vmatpush.bf16.msra.mxu0 %v2066
    %2421 = vmatpush.bf16.msra.mxu0 %v2062
    %2422 = vmatmul.bf16.gmra.mxu0 %v1440
    %v2423 = vpop.f32.mrf.mxu0
    %v2424 = vadd.f32 %v2411, %v2423
    %v2425 = vpop.f32.mrf.mxu0
    %2426 = vdwg.mxu0
    %v2427 = vmax.f32 %v2268, 0.0
    %v2428 = vmax.f32 %v2320, 0.0
    %v2429 = vmax.f32 %v2372, 0.0
    %v2430 = vmax.f32 %v2424, 0.0
    %v2431 = vpack.c.bf16 %v2427, %v2427
    %v2432 = vpack.c.bf16 %v2428, %v2428
    %v2433 = vpack.c.bf16 %v2429, %v2429
    %v2434 = vpack.c.bf16 %v2430, %v2430
    %v2435 = vld [vmem:[%s6] sm:$0xf]
    %v2436 = vld [vmem:[%s6 + $0x4] sm:$0xf]
    %v2437 = vld [vmem:[%s6 + $0x8] sm:$0xf]
    %v2438 = vld [vmem:[%s6 + $0xc] sm:$0xf]
    %v2439 = vld [vmem:[%s6 + $0x10] sm:$0xf]
    %v2440 = vld [vmem:[%s6 + $0x14] sm:$0xf]
    %v2441 = vld [vmem:[%s6 + $0x18] sm:$0xf]
    %v2442 = vld [vmem:[%s6 + $0x1c] sm:$0xf]
    %v2443 = vld [vmem:[%s6 + $0x20] sm:$0xf]
    %v2444 = vld [vmem:[%s6 + $0x24] sm:$0xf]
    %v2445 = vld [vmem:[%s6 + $0x28] sm:$0xf]
    %v2446 = vld [vmem:[%s6 + $0x2c] sm:$0xf]
    %v2447 = vld [vmem:[%s6 + $0x30] sm:$0xf]
    %v2448 = vld [vmem:[%s6 + $0x34] sm:$0xf]
    %v2449 = vld [vmem:[%s6 + $0x38] sm:$0xf]
    %v2450 = vld [vmem:[%s6 + $0x3c] sm:$0xf]
    %v2451 = vld [vmem:[%s6 + $0x40] sm:$0xf]
    %v2452 = vld [vmem:[%s6 + $0x44] sm:$0xf]
    %v2453 = vld [vmem:[%s6 + $0x48] sm:$0xf]
    %v2454 = vld [vmem:[%s6 + $0x4c] sm:$0xf]
    %v2455 = vld [vmem:[%s6 + $0x50] sm:$0xf]
    %v2456 = vld [vmem:[%s6 + $0x54] sm:$0xf]
    %v2457 = vld [vmem:[%s6 + $0x58] sm:$0xf]
    %v2458 = vld [vmem:[%s6 + $0x5c] sm:$0xf]
    %v2459 = vld [vmem:[%s6 + $0x60] sm:$0xf]
    %v2460 = vld [vmem:[%s6 + $0x64] sm:$0xf]
    %v2461 = vld [vmem:[%s6 + $0x68] sm:$0xf]
    %v2462 = vld [vmem:[%s6 + $0x6c] sm:$0xf]
    %v2463 = vld [vmem:[%s6 + $0x70] sm:$0xf]
    %v2464 = vld [vmem:[%s6 + $0x74] sm:$0xf]
    %v2465 = vld [vmem:[%s6 + $0x78] sm:$0xf]
    %v2466 = vld [vmem:[%s6 + $0x7c] sm:$0xf]
    %v2467 = vld [vmem:[%s6 + $0x80] sm:$0xf]
    %v2468 = vld [vmem:[%s6 + $0x84] sm:$0xf]
    %v2469 = vld [vmem:[%s6 + $0x88] sm:$0xf]
    %v2470 = vld [vmem:[%s6 + $0x8c] sm:$0xf]
    %v2471 = vld [vmem:[%s6 + $0x90] sm:$0xf]
    %v2472 = vld [vmem:[%s6 + $0x94] sm:$0xf]
    %v2473 = vld [vmem:[%s6 + $0x98] sm:$0xf]
    %v2474 = vld [vmem:[%s6 + $0x9c] sm:$0xf]
    %v2475 = vld [vmem:[%s6 + $0xa0] sm:$0xf]
    %v2476 = vld [vmem:[%s6 + $0xa4] sm:$0xf]
    %v2477 = vld [vmem:[%s6 + $0xa8] sm:$0xf]
    %v2478 = vld [vmem:[%s6 + $0xac] sm:$0xf]
    %v2479 = vld [vmem:[%s6 + $0xb0] sm:$0xf]
    %v2480 = vld [vmem:[%s6 + $0xb4] sm:$0xf]
    %v2481 = vld [vmem:[%s6 + $0xb8] sm:$0xf]
    %v2482 = vld [vmem:[%s6 + $0xbc] sm:$0xf]
    %v2483 = vld [vmem:[%s6 + $0xc0] sm:$0xf]
    %v2484 = vld [vmem:[%s6 + $0xc4] sm:$0xf]
    %v2485 = vld [vmem:[%s6 + $0xc8] sm:$0xf]
    %v2486 = vld [vmem:[%s6 + $0xcc] sm:$0xf]
    %v2487 = vld [vmem:[%s6 + $0xd0] sm:$0xf]
    %v2488 = vld [vmem:[%s6 + $0xd4] sm:$0xf]
    %v2489 = vld [vmem:[%s6 + $0xd8] sm:$0xf]
    %v2490 = vld [vmem:[%s6 + $0xdc] sm:$0xf]
    %v2491 = vld [vmem:[%s6 + $0xe0] sm:$0xf]
    %v2492 = vld [vmem:[%s6 + $0xe4] sm:$0xf]
    %v2493 = vld [vmem:[%s6 + $0xe8] sm:$0xf]
    %v2494 = vld [vmem:[%s6 + $0xec] sm:$0xf]
    %v2495 = vld [vmem:[%s6 + $0xf0] sm:$0xf]
    %v2496 = vld [vmem:[%s6 + $0xf4] sm:$0xf]
    %v2497 = vld [vmem:[%s6 + $0xf8] sm:$0xf]
    %v2498 = vld [vmem:[%s6 + $0xfc] sm:$0xf]
    %v2499 = vld [vmem:[%s7] sm:$0x1]
    %v2501 = vperm.slane %v2499, 0
    %v2567 = vunpack.c.l.b16 %v2435
    %v2568 = vunpack.c.l.b16 %v2436
    %v2569 = vunpack.c.l.b16 %v2437
    %v2570 = vunpack.c.l.b16 %v2438
    %v2571 = vunpack.c.l.b16 %v2439
    %v2572 = vunpack.c.l.b16 %v2440
    %v2573 = vunpack.c.l.b16 %v2441
    %v2574 = vunpack.c.l.b16 %v2442
    %v2575 = vunpack.c.l.b16 %v2443
    %v2576 = vunpack.c.l.b16 %v2444
    %v2577 = vunpack.c.l.b16 %v2445
    %v2578 = vunpack.c.l.b16 %v2446
    %v2579 = vunpack.c.l.b16 %v2447
    %v2580 = vunpack.c.l.b16 %v2448
    %v2581 = vunpack.c.l.b16 %v2449
    %v2582 = vunpack.c.l.b16 %v2450
    %v2583 = vunpack.c.l.b16 %v2451
    %v2584 = vunpack.c.l.b16 %v2452
    %v2585 = vunpack.c.l.b16 %v2453
    %v2586 = vunpack.c.l.b16 %v2454
    %v2587 = vunpack.c.l.b16 %v2455
    %v2588 = vunpack.c.l.b16 %v2456
    %v2589 = vunpack.c.l.b16 %v2457
    %v2590 = vunpack.c.l.b16 %v2458
    %v2591 = vunpack.c.l.b16 %v2459
    %v2592 = vunpack.c.l.b16 %v2460
    %v2593 = vunpack.c.l.b16 %v2461
    %v2594 = vunpack.c.l.b16 %v2462
    %v2595 = vunpack.c.l.b16 %v2463
    %v2596 = vunpack.c.l.b16 %v2464
    %v2597 = vunpack.c.l.b16 %v2465
    %v2598 = vunpack.c.l.b16 %v2466
    %v2599 = vunpack.c.l.b16 %v2467
    %v2600 = vunpack.c.l.b16 %v2468
    %v2601 = vunpack.c.l.b16 %v2469
    %v2602 = vunpack.c.l.b16 %v2470
    %v2603 = vunpack.c.l.b16 %v2471
    %v2604 = vunpack.c.l.b16 %v2472
    %v2605 = vunpack.c.l.b16 %v2473
    %v2606 = vunpack.c.l.b16 %v2474
    %v2607 = vunpack.c.l.b16 %v2475
    %v2608 = vunpack.c.l.b16 %v2476
    %v2609 = vunpack.c.l.b16 %v2477
    %v2610 = vunpack.c.l.b16 %v2478
    %v2611 = vunpack.c.l.b16 %v2479
    %v2612 = vunpack.c.l.b16 %v2480
    %v2613 = vunpack.c.l.b16 %v2481
    %v2614 = vunpack.c.l.b16 %v2482
    %v2615 = vunpack.c.l.b16 %v2483
    %v2616 = vunpack.c.l.b16 %v2484
    %v2617 = vunpack.c.l.b16 %v2485
    %v2618 = vunpack.c.l.b16 %v2486
    %v2619 = vunpack.c.l.b16 %v2487
    %v2620 = vunpack.c.l.b16 %v2488
    %v2621 = vunpack.c.l.b16 %v2489
    %v2622 = vunpack.c.l.b16 %v2490
    %v2623 = vunpack.c.l.b16 %v2491
    %v2624 = vunpack.c.l.b16 %v2492
    %v2625 = vunpack.c.l.b16 %v2493
    %v2626 = vunpack.c.l.b16 %v2494
    %v2627 = vunpack.c.l.b16 %v2495
    %v2628 = vunpack.c.l.b16 %v2496
    %v2629 = vunpack.c.l.b16 %v2497
    %v2630 = vunpack.c.l.b16 %v2498
    %v2631 = vpack.c.b16 %v2568, %v2567
    %v2632 = vpack.c.b16 %v2570, %v2569
    %v2633 = vpack.c.b16 %v2572, %v2571
    %v2634 = vpack.c.b16 %v2574, %v2573
    %v2635 = vpack.c.b16 %v2576, %v2575
    %v2636 = vpack.c.b16 %v2578, %v2577
    %v2637 = vpack.c.b16 %v2580, %v2579
    %v2638 = vpack.c.b16 %v2582, %v2581
    %v2639 = vpack.c.b16 %v2584, %v2583
    %v2640 = vpack.c.b16 %v2586, %v2585
    %v2641 = vpack.c.b16 %v2588, %v2587
    %v2642 = vpack.c.b16 %v2590, %v2589
    %v2643 = vpack.c.b16 %v2592, %v2591
    %v2644 = vpack.c.b16 %v2594, %v2593
    %v2645 = vpack.c.b16 %v2596, %v2595
    %v2646 = vpack.c.b16 %v2598, %v2597
    %v2647 = vpack.c.b16 %v2600, %v2599
    %v2648 = vpack.c.b16 %v2602, %v2601
    %v2649 = vpack.c.b16 %v2604, %v2603
    %v2650 = vpack.c.b16 %v2606, %v2605
    %v2651 = vpack.c.b16 %v2608, %v2607
    %v2652 = vpack.c.b16 %v2610, %v2609
    %v2653 = vpack.c.b16 %v2612, %v2611
    %v2654 = vpack.c.b16 %v2614, %v2613
    %v2655 = vpack.c.b16 %v2616, %v2615
    %v2656 = vpack.c.b16 %v2618, %v2617
    %v2657 = vpack.c.b16 %v2620, %v2619
    %v2658 = vpack.c.b16 %v2622, %v2621
    %v2659 = vpack.c.b16 %v2624, %v2623
    %v2660 = vpack.c.b16 %v2626, %v2625
    %v2661 = vpack.c.b16 %v2628, %v2627
    %v2662 = vpack.c.b16 %v2630, %v2629
    %2695 = vmatpush.bf16.msra.mxu0 %v2638
    %2696 = vmatpush.bf16.msra.mxu0 %v2637
    %2697 = vmatpush.bf16.msra.mxu0 %v2636
    %2698 = vmatpush.bf16.msra.mxu0 %v2635
    %2699 = vmatpush.bf16.msra.mxu0 %v2634
    %2700 = vmatpush.bf16.msra.mxu0 %v2633
    %2701 = vmatpush.bf16.msra.mxu0 %v2632
    %2702 = vmatpush.bf16.msra.mxu0 %v2631
    %2703 = vmatmul.bf16.gmra.mxu0 %v2431
    %v2704 = vpop.f32.mrf.mxu0
    %v2705 = vadd.f32 %v2501, %v2704
    %v2706 = vpop.f32.mrf.mxu0
    %2707 = vdwg.mxu0
    %2708 = vmatpush.bf16.msra.mxu0 %v2646
    %2709 = vmatpush.bf16.msra.mxu0 %v2645
    %2710 = vmatpush.bf16.msra.mxu0 %v2644
    %2711 = vmatpush.bf16.msra.mxu0 %v2643
    %2712 = vmatpush.bf16.msra.mxu0 %v2642
    %2713 = vmatpush.bf16.msra.mxu0 %v2641
    %2714 = vmatpush.bf16.msra.mxu0 %v2640
    %2715 = vmatpush.bf16.msra.mxu0 %v2639
    %2716 = vmatmul.bf16.gmra.mxu0 %v2432
    %v2717 = vpop.f32.mrf.mxu0
    %v2718 = vadd.f32 %v2705, %v2717
    %v2719 = vpop.f32.mrf.mxu0
    %2720 = vdwg.mxu0
    %2721 = vmatpush.bf16.msra.mxu0 %v2654
    %2722 = vmatpush.bf16.msra.mxu0 %v2653
    %2723 = vmatpush.bf16.msra.mxu0 %v2652
    %2724 = vmatpush.bf16.msra.mxu0 %v2651
    %2725 = vmatpush.bf16.msra.mxu0 %v2650
    %2726 = vmatpush.bf16.msra.mxu0 %v2649
    %2727 = vmatpush.bf16.msra.mxu0 %v2648
    %2728 = vmatpush.bf16.msra.mxu0 %v2647
    %2729 = vmatmul.bf16.gmra.mxu0 %v2433
    %v2730 = vpop.f32.mrf.mxu0
    %v2731 = vadd.f32 %v2718, %v2730
    %v2732 = vpop.f32.mrf.mxu0
    %2733 = vdwg.mxu0
    %2734 = vmatpush.bf16.msra.mxu0 %v2662
    %2735 = vmatpush.bf16.msra.mxu0 %v2661
    %2736 = vmatpush.bf16.msra.mxu0 %v2660
    %2737 = vmatpush.bf16.msra.mxu0 %v2659
    %2738 = vmatpush.bf16.msra.mxu0 %v2658
    %2739 = vmatpush.bf16.msra.mxu0 %v2657
    %2740 = vmatpush.bf16.msra.mxu0 %v2656
    %2741 = vmatpush.bf16.msra.mxu0 %v2655
    %2742 = vmatmul.bf16.gmra.mxu0 %v2434
    %v2743 = vpop.f32.mrf.mxu0
    %v2744 = vadd.f32 %v2731, %v2743
    %v2745 = vpop.f32.mrf.mxu0
    %2746 = vdwg.mxu0
    %v2747 = vmax.f32 %v2744, -10.0
    %v2748 = vmin.f32 %v2747, 2.0
    %v2749 = vmul.f32 %v2748, 1.442695
    %v2750 = vpow.pop %v2749
    %v2751 = vld [vmem:[%s1] sm:$0xff]
    %2753 = vrot.lane.b32.xlu0 %v2751, 22
    %v2754 = vpop.permute.xlu0 %2753
    %v2756 = vmul.f32 %v2750, %v2754
    %2758 = vrot.lane.b32.xlu0 %v2756, 106
    %v2759 = vpop.permute.xlu0 %2758
    %v2761 = vadd.f32 %v2744, %v2759
    %v2762 = vtanh.pop %v2761
    %v2763 = vmul.f32 %v2751, -0.5
    %v2764 = vmul.f32 %v2763, %v2751
    %2766 = vrot.lane.b32.xlu0 %v2748, 106
    %v2767 = vpop.permute.xlu0 %2766
    %v2769 = vsub.f32 %v2764, %v2767
    %v2770 = vsub.f32 %v2769, 0.9189385
    %v2771 = vmul.f32 %v2762, %v2762
    %v2772 = vsub.f32 1.0, %v2771
    %v2773 = vadd.f32 %v2772, 1e-06
    %v2774 = vlog2.pop %v2773
    %v2775 = vmul.f32 %v2774, 0.6931472
    %v2776 = vsub.f32 %v2770, %v2775
    %vm2777 = vcmask 179200
    %v2778 = vsel %vm2777, %v2776, 0.0
    %2779 = vadd.xlane.f32.xlu0 %v2778
    %v2780 = vpop.xlane.xlu0 %2779
    %2782 = vrot.lane.b32.xlu0 %v2744, 22
    %v2783 = vpop.permute.xlu0 %2782
    %2785 = vrot.lane.b32.xlu0 %v2748, 22
    %v2786 = vpop.permute.xlu0 %2785
    %v2788 = vsel %vm2777, %v2762, %v2783
    %vm2789 = vcmask 359424
    %v2790 = vsel %vm2789, %v2788, %v2786
    %vm2791 = vcmask 539648
    %v2792 = vsel %vm2791, %v2790, %v2780
    %vm2793 = vcmask 547840
    %v2794 = vsel %vm2793, %v2792, 0.0
    %2795 = vst [vmem:[%s8] sm:$0xff] %v2794
    // Predicated region
    $region42: #{actor_forward.1} parent=1 // pred_check
      _
    $region43: #{actor_forward.1} parent=1 // pred_check_branch
      %2797 = sbr.rel (0) target = $region45
    $region44: #{actor_forward.1} parent=1 // pred_region
      _
    $region45: #{actor_forward.1} parent=1 // pred_fallthru
      _
    // Predicated region
    $region46: #{actor_forward.1} parent=1 // pred_check
      _
    $region47: #{actor_forward.1} parent=1 // pred_check_branch
      %2799 = sbr.rel (0) target = $region49
    $region48: #{actor_forward.1} parent=1 // pred_region
      _
    $region49: #{actor_forward.1} parent=1 // pred_fallthru
      _
    %2800 = vsyncpa [#allocation3], 1
    %2801 = vsyncpa [#allocation5], 1

</llo_original>
